<compile_context>
chip_gen: v7x
topology: tpu7x:2x2x1
jax: 0.10.0
libtpu: 0.0.40
codegen_flags: <defaults>
</compile_context>

<pallas_src>
import functools

import jax
import jax.numpy as jnp
from jax.experimental import pallas as pl
from jax.experimental.pallas import tpu as pltpu

_PAD = 128  # lane-dense padded width for all tiny head dimensions


def _gsnn_fused_kernel(x_ref, wst_ref, bst_ref, wmv_ref, bmv_ref, eps_ref,
                       wfc_ref, bfc_ref, wcls_ref, bcls_ref,
                       mean_ref, var_ref, z_ref, cl_ref, pred_ref, vote_ref,
                       acc_ref, *, inv_s, num_classes, vote_type):
    s_idx = pl.program_id(1)

    @pl.when(s_idx == 0)
    def _():
        acc_ref[...] = jnp.zeros_like(acc_ref)

    # ---- 1x1x1 conv stem on the VPU: C is tiny, so C broadcast FMAs (no MXU) ----
    x = x_ref[0]                                   # (C, S_TILE); lane axis = spatial
    c_in = x.shape[0]
    h = wst_ref[0] * x[0:1, :]                     # (HID,1)*(1,S_TILE) -> (HID, S_TILE)
    for c in range(1, c_in):                       # static unroll, C small
        h = h + wst_ref[c] * x[c:c + 1, :]
    h = jnp.maximum(h + bst_ref[...], 0.0)         # bias + ReLU, (HID, S_TILE)

    # ---- partial global-average-pool: ones-row matmul -> lane-dense (1, HID) row ----
    ones_row = jnp.ones((1, h.shape[1]), jnp.float32)
    acc_ref[...] += jax.lax.dot_general(
        ones_row, h, (((1,), (1,)), ((), ())),
        preferred_element_type=jnp.float32)        # (1, HID)

    # ---- finalize once per batch element, on the last spatial tile ----
    @pl.when(s_idx == pl.num_programs(1) - 1)
    def _():
        pooled = acc_ref[...] * inv_s              # (1, HID) global average pool
        # merged mean | log-var head (single dot, padded to 2*128 lanes)
        mv = jnp.dot(pooled, wmv_ref[...],
                     preferred_element_type=jnp.float32) + bmv_ref[...]
        mean_p = mv[:, :_PAD]                      # (1, 128)
        var_p = jnp.exp(mv[:, _PAD:])              # (1, 128)  var = exp(log-var)

        # reparameterized sampling: z = mean + sqrt(var) * eps   (eps zero-padded)
        eps = eps_ref[0]                           # (N, 128)
        z = mean_p + jnp.sqrt(var_p) * eps         # (N, 128)

        # classifier: Linear -> ReLU -> Linear (dropout = identity at inference)
        cl = jnp.maximum(
            jnp.dot(z, wfc_ref[...], preferred_element_type=jnp.float32)
            + bfc_ref[...], 0.0)                   # (N, 128)
        logits = jnp.dot(cl, wcls_ref[...],
                         preferred_element_type=jnp.float32) + bcls_ref[...]

        # vote over samples (padded class lanes masked out)
        lane = jax.lax.broadcasted_iota(jnp.int32, logits.shape, 1)
        valid = lane < num_classes
        masked = jnp.where(valid, logits, -1e30)
        m = jnp.max(masked, axis=-1, keepdims=True)

        if vote_type == 'soft':
            # soft vote: masked softmax over the real K classes, mean over samples
            e = jnp.where(valid, jnp.exp(masked - m), 0.0)
            p = e / jnp.sum(e, axis=-1, keepdims=True)
            vote = jnp.mean(p, axis=0, keepdims=True)          # (1, 128)
        else:
            # hard vote: first-max argmax per sample, one-hot, count over samples
            is_max = masked >= m                               # (N, 128)
            first_idx = jnp.min(jnp.where(is_max, lane, num_classes),
                                axis=-1, keepdims=True)        # (N, 1)
            onehot = (lane == first_idx).astype(jnp.float32)   # (N, 128)
            vote = jnp.sum(onehot, axis=0, keepdims=True)      # (1, 128)

        mean_ref[0] = mean_p
        var_ref[0] = var_p
        z_ref[0] = z
        cl_ref[0] = cl
        pred_ref[0] = logits
        vote_ref[0] = vote


def _pad2(w, rows, cols):
    out = jnp.zeros((rows, cols), jnp.float32)
    return out.at[:w.shape[0], :w.shape[1]].set(w.astype(jnp.float32))


def _pick_s_tile(s, max_tile=1024):
    if s % 128 == 0:
        t = min(s, max_tile)
        while t >= 128:
            if s % t == 0:
                return t
            t -= 128
    return s  # fall back to a single full-S block


def gsnn_i3d_forward(x, params, eps, vote_type='soft'):
    """GSNNI3D inference forward.

    Returns (pred, temporal_latents, class_latent, mean, var, vote)."""
    assert vote_type in ('soft', 'hard')
    B, C, T, H, W = x.shape
    S = T * H * W
    x3 = x.reshape(B, C, S).astype(jnp.float32)    # no transpose: lane axis = S

    HID = params['w_stem'].shape[1]
    L = params['w_mean'].shape[1]
    HC = params['w_fc'].shape[1]
    K = params['w_cls'].shape[1]
    N = eps.shape[1]
    assert L <= _PAD and HC <= _PAD and K <= _PAD

    s_tile = _pick_s_tile(S)
    n_s = S // s_tile

    # ---- pack / pad parameters once in the wrapper (tiny tensors, XLA-side) ----
    w_stem_c = params['w_stem'].astype(jnp.float32)[:, :, None]   # (C, HID, 1)
    b_stem_c = params['b_stem'].astype(jnp.float32).reshape(HID, 1)
    w_mv = jnp.zeros((HID, 2 * _PAD), jnp.float32)
    w_mv = w_mv.at[:, :L].set(params['w_mean'].astype(jnp.float32))
    w_mv = w_mv.at[:, _PAD:_PAD + L].set(params['w_var'].astype(jnp.float32))
    b_mv = jnp.zeros((1, 2 * _PAD), jnp.float32)
    b_mv = b_mv.at[:, :L].set(params['b_mean'].astype(jnp.float32))
    b_mv = b_mv.at[:, _PAD:_PAD + L].set(params['b_var'].astype(jnp.float32))
    w_fc = _pad2(params['w_fc'], _PAD, _PAD)
    b_fc = _pad2(params['b_fc'], 1, _PAD)
    w_cls = _pad2(params['w_cls'], _PAD, _PAD)
    b_cls = _pad2(params['b_cls'], 1, _PAD)
    eps_p = jnp.zeros((B, N, _PAD), jnp.float32).at[:, :, :L].set(
        eps.astype(jnp.float32))

    kernel = functools.partial(_gsnn_fused_kernel, inv_s=1.0 / float(S),
                               num_classes=K, vote_type=vote_type)

    const2 = lambda b, s: (0, 0)
    const3 = lambda b, s: (0, 0, 0)
    per_b3 = lambda b, s: (b, 0, 0)

    outs = pl.pallas_call(
        kernel,
        grid=(B, n_s),
        in_specs=[
            pl.BlockSpec((1, C, s_tile), lambda b, s: (b, 0, s)),   # x
            pl.BlockSpec((C, HID, 1), const3),                      # stem weight (per-channel cols)
            pl.BlockSpec((HID, 1), const2),                         # stem bias
            pl.BlockSpec((HID, 2 * _PAD), const2),                  # merged mean|logvar weight
            pl.BlockSpec((1, 2 * _PAD), const2),                    # merged mean|logvar bias
            pl.BlockSpec((1, N, _PAD), per_b3),                     # eps (zero padded)
            pl.BlockSpec((_PAD, _PAD), const2),                     # fc weight (padded)
            pl.BlockSpec((1, _PAD), const2),                        # fc bias
            pl.BlockSpec((_PAD, _PAD), const2),                     # cls weight (padded)
            pl.BlockSpec((1, _PAD), const2),                        # cls bias
        ],
        out_specs=[
            pl.BlockSpec((1, 1, _PAD), per_b3),   # mean
            pl.BlockSpec((1, 1, _PAD), per_b3),   # var
            pl.BlockSpec((1, N, _PAD), per_b3),   # z (temporal latents)
            pl.BlockSpec((1, N, _PAD), per_b3),   # class latent
            pl.BlockSpec((1, N, _PAD), per_b3),   # pred logits
            pl.BlockSpec((1, 1, _PAD), per_b3),   # vote
        ],
        out_shape=[
            jax.ShapeDtypeStruct((B, 1, _PAD), jnp.float32),
            jax.ShapeDtypeStruct((B, 1, _PAD), jnp.float32),
            jax.ShapeDtypeStruct((B, N, _PAD), jnp.float32),
            jax.ShapeDtypeStruct((B, N, _PAD), jnp.float32),
            jax.ShapeDtypeStruct((B, N, _PAD), jnp.float32),
            jax.ShapeDtypeStruct((B, 1, _PAD), jnp.float32),
        ],
        scratch_shapes=[pltpu.VMEM((1, HID), jnp.float32)],   # pooled-sum accumulator
        compiler_params=pltpu.CompilerParams(
            dimension_semantics=("parallel", "arbitrary")),
    )(x3, w_stem_c, b_stem_c, w_mv, b_mv, eps_p, w_fc, b_fc, w_cls, b_cls)

    mean_p, var_p, z_p, cl_p, pred_p, vote_p = outs
    pred = pred_p[:, :, :K]
    z = z_p[:, :, :L]
    cl = cl_p[:, :, :HC]
    mean = mean_p[:, 0, :L]
    var = var_p[:, 0, :L]
    vote = vote_p[:, 0, :K]
    return pred, z, cl, mean, var, vote


if __name__ == "__main__":
    key = jax.random.PRNGKey(0)
    B, C, T, H, W = 2, 4, 8, 16, 16
    latent_planes = 8
    num_classes = 10
    num_samples = 4
    hidden = 32
    cls_hidden = 32

    keys = jax.random.split(key, 8)

    def he(k, shape, fan_out):
        # deterministic Kaiming-normal-like init (fan_out, relu), matching _he_init
        return (jax.random.normal(k, shape, jnp.float32)
                * jnp.sqrt(2.0 / fan_out)).astype(jnp.float32)

    params = {
        'w_stem': he(keys[0], (C, hidden), hidden),
        'b_stem': jnp.zeros((1, hidden), jnp.float32),
        'w_mean': he(keys[1], (hidden, latent_planes), latent_planes),
        'b_mean': jnp.zeros((1, latent_planes), jnp.float32),
        'w_var':  he(keys[2], (hidden, latent_planes), latent_planes),
        'b_var':  jnp.zeros((1, latent_planes), jnp.float32),
        'w_fc':   he(keys[3], (latent_planes, cls_hidden), cls_hidden),
        'b_fc':   jnp.zeros((1, cls_hidden), jnp.float32),
        'w_cls':  he(keys[4], (cls_hidden, num_classes), num_classes),
        'b_cls':  jnp.zeros((1, num_classes), jnp.float32),
    }

    x = jax.random.normal(keys[5], (B, C, T, H, W), jnp.float32)
    eps = jax.random.normal(keys[6], (B, num_samples, latent_planes), jnp.float32)

    # soft vote
    outs = gsnn_i3d_forward(x, params, eps, vote_type='soft')
    jax.block_until_ready(outs)
    pred, z, cl, mean, var, vote = outs
    assert pred.shape == (B, num_samples, num_classes)
    assert z.shape == (B, num_samples, latent_planes)
    assert cl.shape == (B, num_samples, cls_hidden)
    assert mean.shape == (B, latent_planes)
    assert var.shape == (B, latent_planes)
    assert vote.shape == (B, num_classes)
    assert bool(jnp.all(jnp.isfinite(pred))) and bool(jnp.all(jnp.isfinite(vote)))
    # soft-vote rows must sum to 1
    assert bool(jnp.allclose(jnp.sum(vote, axis=-1), 1.0, atol=1e-4))

    # hard vote
    outs_h = gsnn_i3d_forward(x, params, eps, vote_type='hard')
    jax.block_until_ready(outs_h)
    vote_h = outs_h[5]
    assert vote_h.shape == (B, num_classes)
    # hard-vote rows are per-class counts summing to num_samples
    assert bool(jnp.allclose(jnp.sum(vote_h, axis=-1), float(num_samples)))
    assert bool(jnp.all(vote_h >= 0.0))

    print("KERNEL_OK")
</pallas_src>

<mosaic_0001>
module attributes {stable_mosaic.version = 11 : i64} {
  func.func @_gsnn_fused_kernel(%arg0: i32, %arg1: i32, %arg2: memref<1x4x1024xf32, #tpu.memory_space<vmem>>, %arg3: memref<4x32x1xf32, #tpu.memory_space<vmem>>, %arg4: memref<32x1xf32, #tpu.memory_space<vmem>>, %arg5: memref<32x256xf32, #tpu.memory_space<vmem>>, %arg6: memref<1x256xf32, #tpu.memory_space<vmem>>, %arg7: memref<1x4x128xf32, #tpu.memory_space<vmem>>, %arg8: memref<128x128xf32, #tpu.memory_space<vmem>>, %arg9: memref<1x128xf32, #tpu.memory_space<vmem>>, %arg10: memref<128x128xf32, #tpu.memory_space<vmem>>, %arg11: memref<1x128xf32, #tpu.memory_space<vmem>>, %arg12: memref<1x1x128xf32, #tpu.memory_space<vmem>>, %arg13: memref<1x1x128xf32, #tpu.memory_space<vmem>>, %arg14: memref<1x4x128xf32, #tpu.memory_space<vmem>>, %arg15: memref<1x4x128xf32, #tpu.memory_space<vmem>>, %arg16: memref<1x4x128xf32, #tpu.memory_space<vmem>>, %arg17: memref<1x1x128xf32, #tpu.memory_space<vmem>>, %arg18: memref<1x32xf32, #tpu.memory_space<vmem>>) attributes {dimension_semantics = [#tpu.dimension_semantics<parallel>, #tpu.dimension_semantics<arbitrary>], iteration_bounds = array<i64: 2, 2>, scalar_prefetch = 0 : i64, scratch_operands = 1 : i64, tpu.core_type = #tpu.core_type<tc>, window_params = [{transform_indices = @transform_0, window_bounds = array<i64: 1, 4, 1024>}, {pipeline_mode = #tpu.pipeline_mode<synchronous>, transform_indices = @transform_1, window_bounds = array<i64: 4, 32, 1>}, {pipeline_mode = #tpu.pipeline_mode<synchronous>, transform_indices = @transform_2, window_bounds = array<i64: 32, 1>}, {pipeline_mode = #tpu.pipeline_mode<synchronous>, transform_indices = @transform_3, window_bounds = array<i64: 32, 256>}, {pipeline_mode = #tpu.pipeline_mode<synchronous>, transform_indices = @transform_4, window_bounds = array<i64: 1, 256>}, {transform_indices = @transform_5, window_bounds = array<i64: 1, 4, 128>}, {pipeline_mode = #tpu.pipeline_mode<synchronous>, transform_indices = @transform_6, window_bounds = array<i64: 128, 128>}, {pipeline_mode = #tpu.pipeline_mode<synchronous>, transform_indices = @transform_7, window_bounds = array<i64: 1, 128>}, {pipeline_mode = #tpu.pipeline_mode<synchronous>, transform_indices = @transform_8, window_bounds = array<i64: 128, 128>}, {pipeline_mode = #tpu.pipeline_mode<synchronous>, transform_indices = @transform_9, window_bounds = array<i64: 1, 128>}, {transform_indices = @transform_10, window_bounds = array<i64: 1, 1, 128>}, {transform_indices = @transform_11, window_bounds = array<i64: 1, 1, 128>}, {transform_indices = @transform_12, window_bounds = array<i64: 1, 4, 128>}, {transform_indices = @transform_13, window_bounds = array<i64: 1, 4, 128>}, {transform_indices = @transform_14, window_bounds = array<i64: 1, 4, 128>}, {transform_indices = @transform_15, window_bounds = array<i64: 1, 1, 128>}]} {
    %c0_i32 = arith.constant 0 : i32
    %0 = arith.cmpi eq, %arg1, %c0_i32 : i32
    %1 = arith.extui %0 : i1 to i32
    %c0_i32_0 = arith.constant 0 : i32
    %2 = arith.cmpi ne, %1, %c0_i32_0 : i32
    scf.if %2 {
      %cst_21 = arith.constant 0.000000e+00 : f32
      %45 = vector.broadcast %cst_21 : f32 to vector<1x32xf32>
      %c0_22 = arith.constant 0 : index
      %c0_23 = arith.constant 0 : index
      %46 = vector.load %arg18[%c0_22, %c0_23] : memref<1x32xf32, #tpu.memory_space<vmem>>, vector<1x32xf32>
      tpu.vector_store %arg18[%c0_22, %c0_23], %45 {strides = array<i32>} : memref<1x32xf32, #tpu.memory_space<vmem>>, vector<1x32xf32>,
    } else {
    }
    %c0 = arith.constant 0 : index
    %c0_1 = arith.constant 0 : index
    %c0_2 = arith.constant 0 : index
    %3 = vector.load %arg2[%c0, %c0_1, %c0_2] : memref<1x4x1024xf32, #tpu.memory_space<vmem>>, vector<1x4x1024xf32>
    %4 = vector.shape_cast %3 : vector<1x4x1024xf32> to vector<4x1024xf32>
    %c0_3 = arith.constant 0 : index
    %c0_4 = arith.constant 0 : index
    %c0_5 = arith.constant 0 : index
    %5 = vector.load %arg3[%c0_3, %c0_4, %c0_5] : memref<4x32x1xf32, #tpu.memory_space<vmem>>, vector<1x32x1xf32>
    %6 = vector.shape_cast %5 : vector<1x32x1xf32> to vector<32x1xf32>
    %7 = vector.extract_strided_slice %4 {offsets = [0, 0], sizes = [1, 1024], strides = [1, 1]} : vector<4x1024xf32> to vector<1x1024xf32>
    %8 = vector.broadcast %6 : vector<32x1xf32> to vector<32x1024xf32>
    %9 = vector.broadcast %7 : vector<1x1024xf32> to vector<32x1024xf32>
    %10 = arith.mulf %8, %9 : vector<32x1024xf32>
    %c1 = arith.constant 1 : index
    %c0_6 = arith.constant 0 : index
    %c0_7 = arith.constant 0 : index
    %11 = vector.load %arg3[%c1, %c0_6, %c0_7] : memref<4x32x1xf32, #tpu.memory_space<vmem>>, vector<1x32x1xf32>
    %12 = vector.shape_cast %11 : vector<1x32x1xf32> to vector<32x1xf32>
    %13 = vector.extract_strided_slice %4 {offsets = [1, 0], sizes = [1, 1024], strides = [1, 1]} : vector<4x1024xf32> to vector<1x1024xf32>
    %14 = vector.broadcast %12 : vector<32x1xf32> to vector<32x1024xf32>
    %15 = vector.broadcast %13 : vector<1x1024xf32> to vector<32x1024xf32>
    %16 = arith.mulf %14, %15 : vector<32x1024xf32>
    %17 = arith.addf %10, %16 : vector<32x1024xf32>
    %c2 = arith.constant 2 : index
    %c0_8 = arith.constant 0 : index
    %c0_9 = arith.constant 0 : index
    %18 = vector.load %arg3[%c2, %c0_8, %c0_9] : memref<4x32x1xf32, #tpu.memory_space<vmem>>, vector<1x32x1xf32>
    %19 = vector.shape_cast %18 : vector<1x32x1xf32> to vector<32x1xf32>
    %20 = vector.extract_strided_slice %4 {offsets = [2, 0], sizes = [1, 1024], strides = [1, 1]} : vector<4x1024xf32> to vector<1x1024xf32>
    %21 = vector.broadcast %19 : vector<32x1xf32> to vector<32x1024xf32>
    %22 = vector.broadcast %20 : vector<1x1024xf32> to vector<32x1024xf32>
    %23 = arith.mulf %21, %22 : vector<32x1024xf32>
    %24 = arith.addf %17, %23 : vector<32x1024xf32>
    %c3 = arith.constant 3 : index
    %c0_10 = arith.constant 0 : index
    %c0_11 = arith.constant 0 : index
    %25 = vector.load %arg3[%c3, %c0_10, %c0_11] : memref<4x32x1xf32, #tpu.memory_space<vmem>>, vector<1x32x1xf32>
    %26 = vector.shape_cast %25 : vector<1x32x1xf32> to vector<32x1xf32>
    %27 = vector.extract_strided_slice %4 {offsets = [3, 0], sizes = [1, 1024], strides = [1, 1]} : vector<4x1024xf32> to vector<1x1024xf32>
    %28 = vector.broadcast %26 : vector<32x1xf32> to vector<32x1024xf32>
    %29 = vector.broadcast %27 : vector<1x1024xf32> to vector<32x1024xf32>
    %30 = arith.mulf %28, %29 : vector<32x1024xf32>
    %31 = arith.addf %24, %30 : vector<32x1024xf32>
    %c0_12 = arith.constant 0 : index
    %c0_13 = arith.constant 0 : index
    %32 = vector.load %arg4[%c0_12, %c0_13] : memref<32x1xf32, #tpu.memory_space<vmem>>, vector<32x1xf32>
    %33 = vector.broadcast %32 : vector<32x1xf32> to vector<32x1024xf32>
    %34 = arith.addf %31, %33 : vector<32x1024xf32>
    %cst = arith.constant 0.000000e+00 : f32
    %35 = vector.broadcast %cst : f32 to vector<32x1024xf32>
    %36 = arith.maximumf %34, %35 : vector<32x1024xf32>
    %cst_14 = arith.constant 1.000000e+00 : f32
    %37 = vector.broadcast %cst_14 : f32 to vector<1x1024xf32>
    %c0_15 = arith.constant 0 : index
    %c0_16 = arith.constant 0 : index
    %38 = vector.load %arg18[%c0_15, %c0_16] : memref<1x32xf32, #tpu.memory_space<vmem>>, vector<1x32xf32>
    %cst_17 = arith.constant dense<0.000000e+00> : vector<1x32xf32>
    %39 = tpu.matmul %37, %36, %cst_17 {dimension_numbers = #tpu.dot_dimension_numbers<[1], [1], [0], [0], [0, 0, 1, 0], [], []>} : vector<1x1024xf32>, vector<32x1024xf32>, vector<1x32xf32> -> vector<1x32xf32>
    %40 = arith.addf %38, %39 : vector<1x32xf32>
    %c0_18 = arith.constant 0 : index
    %c0_19 = arith.constant 0 : index
    %41 = vector.load %arg18[%c0_18, %c0_19] : memref<1x32xf32, #tpu.memory_space<vmem>>, vector<1x32xf32>
    tpu.vector_store %arg18[%c0_18, %c0_19], %40 {strides = array<i32>} : memref<1x32xf32, #tpu.memory_space<vmem>>, vector<1x32xf32>,
    %c1_i32 = arith.constant 1 : i32
    %42 = arith.cmpi eq, %arg1, %c1_i32 : i32
    %43 = arith.extui %42 : i1 to i32
    %c0_i32_20 = arith.constant 0 : i32
    %44 = arith.cmpi ne, %43, %c0_i32_20 : i32
    scf.if %44 {
      %c0_21 = arith.constant 0 : index
      %c0_22 = arith.constant 0 : index
      %45 = vector.load %arg18[%c0_21, %c0_22] : memref<1x32xf32, #tpu.memory_space<vmem>>, vector<1x32xf32>
      %cst_23 = arith.constant 4.8828125E-4 : f32
      %46 = vector.broadcast %cst_23 : f32 to vector<1x32xf32>
      %47 = arith.mulf %45, %46 : vector<1x32xf32>
      %c0_24 = arith.constant 0 : index
      %c0_25 = arith.constant 0 : index
      %48 = vector.load %arg5[%c0_24, %c0_25] : memref<32x256xf32, #tpu.memory_space<vmem>>, vector<32x256xf32>
      %cst_26 = arith.constant dense<0.000000e+00> : vector<1x256xf32>
      %49 = tpu.matmul %47, %48, %cst_26 {dimension_numbers = #tpu.dot_dimension_numbers<[1], [0], [0], [1], [0, 0, 1, 1], [], []>} : vector<1x32xf32>, vector<32x256xf32>, vector<1x256xf32> -> vector<1x256xf32>
      %c0_27 = arith.constant 0 : index
      %c0_28 = arith.constant 0 : index
      %50 = vector.load %arg6[%c0_27, %c0_28] : memref<1x256xf32, #tpu.memory_space<vmem>>, vector<1x256xf32>
      %51 = arith.addf %49, %50 : vector<1x256xf32>
      %52 = vector.extract_strided_slice %51 {offsets = [0, 0], sizes = [1, 128], strides = [1, 1]} : vector<1x256xf32> to vector<1x128xf32>
      %53 = vector.extract_strided_slice %51 {offsets = [0, 128], sizes = [1, 128], strides = [1, 1]} : vector<1x256xf32> to vector<1x128xf32>
      %54 = math.exp %53 : vector<1x128xf32>
      %c0_29 = arith.constant 0 : index
      %c0_30 = arith.constant 0 : index
      %c0_31 = arith.constant 0 : index
      %55 = vector.load %arg7[%c0_29, %c0_30, %c0_31] : memref<1x4x128xf32, #tpu.memory_space<vmem>>, vector<1x4x128xf32>
      %56 = vector.shape_cast %55 : vector<1x4x128xf32> to vector<4x128xf32>
      %57 = math.sqrt %54 : vector<1x128xf32>
      %58 = vector.broadcast %57 : vector<1x128xf32> to vector<4x128xf32>
      %59 = arith.mulf %58, %56 : vector<4x128xf32>
      %60 = vector.broadcast %52 : vector<1x128xf32> to vector<4x128xf32>
      %61 = arith.addf %60, %59 : vector<4x128xf32>
      %c0_32 = arith.constant 0 : index
      %c0_33 = arith.constant 0 : index
      %62 = vector.load %arg8[%c0_32, %c0_33] : memref<128x128xf32, #tpu.memory_space<vmem>>, vector<128x128xf32>
      %cst_34 = arith.constant dense<0.000000e+00> : vector<4x128xf32>
      %63 = tpu.matmul %61, %62, %cst_34 {dimension_numbers = #tpu.dot_dimension_numbers<[1], [0], [0], [1], [0, 0, 1, 1], [], []>} : vector<4x128xf32>, vector<128x128xf32>, vector<4x128xf32> -> vector<4x128xf32>
      %c0_35 = arith.constant 0 : index
      %c0_36 = arith.constant 0 : index
      %64 = vector.load %arg9[%c0_35, %c0_36] : memref<1x128xf32, #tpu.memory_space<vmem>>, vector<1x128xf32>
      %65 = vector.broadcast %64 : vector<1x128xf32> to vector<4x128xf32>
      %66 = arith.addf %63, %65 : vector<4x128xf32>
      %cst_37 = arith.constant 0.000000e+00 : f32
      %67 = vector.broadcast %cst_37 : f32 to vector<4x128xf32>
      %68 = arith.maximumf %66, %67 : vector<4x128xf32>
      %c0_38 = arith.constant 0 : index
      %c0_39 = arith.constant 0 : index
      %69 = vector.load %arg10[%c0_38, %c0_39] : memref<128x128xf32, #tpu.memory_space<vmem>>, vector<128x128xf32>
      %cst_40 = arith.constant dense<0.000000e+00> : vector<4x128xf32>
      %70 = tpu.matmul %68, %69, %cst_40 {dimension_numbers = #tpu.dot_dimension_numbers<[1], [0], [0], [1], [0, 0, 1, 1], [], []>} : vector<4x128xf32>, vector<128x128xf32>, vector<4x128xf32> -> vector<4x128xf32>
      %c0_41 = arith.constant 0 : index
      %c0_42 = arith.constant 0 : index
      %71 = vector.load %arg11[%c0_41, %c0_42] : memref<1x128xf32, #tpu.memory_space<vmem>>, vector<1x128xf32>
      %72 = vector.broadcast %71 : vector<1x128xf32> to vector<4x128xf32>
      %73 = arith.addf %70, %72 : vector<4x128xf32>
      %74 = tpu.iota {dimensions = array<i32: 1>} : vector<4x128xi32>
      %c10_i32 = arith.constant 10 : i32
      %75 = vector.broadcast %c10_i32 : i32 to vector<4x128xi32>
      %76 = arith.cmpi slt, %74, %75 : vector<4x128xi32>
      %cst_43 = arith.constant -1.000000e+30 : f32
      %77 = vector.broadcast %cst_43 : f32 to vector<4x128xf32>
      %78 = arith.select %76, %73, %77 : vector<4x128xi1>, vector<4x128xf32>
      %cst_44 = arith.constant dense<0xFF800000> : vector<4xf32>
      %79 = vector.multi_reduction <maximumf>, %78, %cst_44 [1] : vector<4x128xf32> to vector<4xf32>
      %80 = vector.shape_cast %79 : vector<4xf32> to vector<4x1xf32>
      %81 = vector.broadcast %80 : vector<4x1xf32> to vector<4x128xf32>
      %82 = arith.subf %78, %81 : vector<4x128xf32>
      %83 = math.exp %82 : vector<4x128xf32>
      %cst_45 = arith.constant 0.000000e+00 : f32
      %84 = vector.broadcast %cst_45 : f32 to vector<4x128xf32>
      %85 = arith.select %76, %83, %84 : vector<4x128xi1>, vector<4x128xf32>
      %cst_46 = arith.constant dense<0.000000e+00> : vector<4xf32>
      %86 = vector.multi_reduction <add>, %85, %cst_46 [1] : vector<4x128xf32> to vector<4xf32>
      %87 = vector.shape_cast %86 : vector<4xf32> to vector<4x1xf32>
      %88 = vector.broadcast %87 : vector<4x1xf32> to vector<4x128xf32>
      %89 = arith.divf %85, %88 : vector<4x128xf32>
      %cst_47 = arith.constant dense<0.000000e+00> : vector<128xf32>
      %90 = vector.multi_reduction <add>, %89, %cst_47 [0] : vector<4x128xf32> to vector<128xf32>
      %91 = vector.shape_cast %90 : vector<128xf32> to vector<1x128xf32>
      %cst_48 = arith.constant 4.000000e+00 : f32
      %92 = vector.broadcast %cst_48 : f32 to vector<1x128xf32>
      %93 = arith.divf %91, %92 : vector<1x128xf32>
      %c0_49 = arith.constant 0 : index
      %c0_50 = arith.constant 0 : index
      %c0_51 = arith.constant 0 : index
      %94 = vector.load %arg12[%c0_49, %c0_50, %c0_51] : memref<1x1x128xf32, #tpu.memory_space<vmem>>, vector<1x1x128xf32>
      %95 = vector.shape_cast %94 : vector<1x1x128xf32> to vector<1x128xf32>
      %96 = vector.shape_cast %52 : vector<1x128xf32> to vector<1x1x128xf32>
      tpu.vector_store %arg12[%c0_49, %c0_50, %c0_51], %96 {strides = array<i32>} : memref<1x1x128xf32, #tpu.memory_space<vmem>>, vector<1x1x128xf32>,
      %c0_52 = arith.constant 0 : index
      %c0_53 = arith.constant 0 : index
      %c0_54 = arith.constant 0 : index
      %97 = vector.load %arg13[%c0_52, %c0_53, %c0_54] : memref<1x1x128xf32, #tpu.memory_space<vmem>>, vector<1x1x128xf32>
      %98 = vector.shape_cast %97 : vector<1x1x128xf32> to vector<1x128xf32>
      %99 = vector.shape_cast %54 : vector<1x128xf32> to vector<1x1x128xf32>
      tpu.vector_store %arg13[%c0_52, %c0_53, %c0_54], %99 {strides = array<i32>} : memref<1x1x128xf32, #tpu.memory_space<vmem>>, vector<1x1x128xf32>,
      %c0_55 = arith.constant 0 : index
      %c0_56 = arith.constant 0 : index
      %c0_57 = arith.constant 0 : index
      %100 = vector.load %arg14[%c0_55, %c0_56, %c0_57] : memref<1x4x128xf32, #tpu.memory_space<vmem>>, vector<1x4x128xf32>
      %101 = vector.shape_cast %100 : vector<1x4x128xf32> to vector<4x128xf32>
      %102 = vector.shape_cast %61 : vector<4x128xf32> to vector<1x4x128xf32>
      tpu.vector_store %arg14[%c0_55, %c0_56, %c0_57], %102 {strides = array<i32>} : memref<1x4x128xf32, #tpu.memory_space<vmem>>, vector<1x4x128xf32>,
      %c0_58 = arith.constant 0 : index
      %c0_59 = arith.constant 0 : index
      %c0_60 = arith.constant 0 : index
      %103 = vector.load %arg15[%c0_58, %c0_59, %c0_60] : memref<1x4x128xf32, #tpu.memory_space<vmem>>, vector<1x4x128xf32>
      %104 = vector.shape_cast %103 : vector<1x4x128xf32> to vector<4x128xf32>
      %105 = vector.shape_cast %68 : vector<4x128xf32> to vector<1x4x128xf32>
      tpu.vector_store %arg15[%c0_58, %c0_59, %c0_60], %105 {strides = array<i32>} : memref<1x4x128xf32, #tpu.memory_space<vmem>>, vector<1x4x128xf32>,
      %c0_61 = arith.constant 0 : index
      %c0_62 = arith.constant 0 : index
      %c0_63 = arith.constant 0 : index
      %106 = vector.load %arg16[%c0_61, %c0_62, %c0_63] : memref<1x4x128xf32, #tpu.memory_space<vmem>>, vector<1x4x128xf32>
      %107 = vector.shape_cast %106 : vector<1x4x128xf32> to vector<4x128xf32>
      %108 = vector.shape_cast %73 : vector<4x128xf32> to vector<1x4x128xf32>
      tpu.vector_store %arg16[%c0_61, %c0_62, %c0_63], %108 {strides = array<i32>} : memref<1x4x128xf32, #tpu.memory_space<vmem>>, vector<1x4x128xf32>,
      %c0_64 = arith.constant 0 : index
      %c0_65 = arith.constant 0 : index
      %c0_66 = arith.constant 0 : index
      %109 = vector.load %arg17[%c0_64, %c0_65, %c0_66] : memref<1x1x128xf32, #tpu.memory_space<vmem>>, vector<1x1x128xf32>
      %110 = vector.shape_cast %109 : vector<1x1x128xf32> to vector<1x128xf32>
      %111 = vector.shape_cast %93 : vector<1x128xf32> to vector<1x1x128xf32>
      tpu.vector_store %arg17[%c0_64, %c0_65, %c0_66], %111 {strides = array<i32>} : memref<1x1x128xf32, #tpu.memory_space<vmem>>, vector<1x1x128xf32>,
    } else {
    }
    return
  }
  func.func @transform_0(%arg0: i32, %arg1: i32) -> (i32, i32, i32) {
    %c0_i32 = arith.constant 0 : i32
    %c0_i32_0 = arith.constant 0 : i32
    return %arg0, %c0_i32, %arg1 : i32, i32, i32
  }
  func.func @transform_1(%arg0: i32, %arg1: i32) -> (i32, i32, i32) {
    %c0_i32 = arith.constant 0 : i32
    %c0_i32_0 = arith.constant 0 : i32
    %c0_i32_1 = arith.constant 0 : i32
    %c0_i32_2 = arith.constant 0 : i32
    return %c0_i32, %c0_i32_0, %c0_i32_1 : i32, i32, i32
  }
  func.func @transform_2(%arg0: i32, %arg1: i32) -> (i32, i32) {
    %c0_i32 = arith.constant 0 : i32
    %c0_i32_0 = arith.constant 0 : i32
    %c0_i32_1 = arith.constant 0 : i32
    return %c0_i32, %c0_i32_0 : i32, i32
  }
  func.func @transform_3(%arg0: i32, %arg1: i32) -> (i32, i32) {
    %c0_i32 = arith.constant 0 : i32
    %c0_i32_0 = arith.constant 0 : i32
    %c0_i32_1 = arith.constant 0 : i32
    return %c0_i32, %c0_i32_0 : i32, i32
  }
  func.func @transform_4(%arg0: i32, %arg1: i32) -> (i32, i32) {
    %c0_i32 = arith.constant 0 : i32
    %c0_i32_0 = arith.constant 0 : i32
    %c0_i32_1 = arith.constant 0 : i32
    return %c0_i32, %c0_i32_0 : i32, i32
  }
  func.func @transform_5(%arg0: i32, %arg1: i32) -> (i32, i32, i32) {
    %c0_i32 = arith.constant 0 : i32
    %c0_i32_0 = arith.constant 0 : i32
    %c0_i32_1 = arith.constant 0 : i32
    return %arg0, %c0_i32, %c0_i32_0 : i32, i32, i32
  }
  func.func @transform_6(%arg0: i32, %arg1: i32) -> (i32, i32) {
    %c0_i32 = arith.constant 0 : i32
    %c0_i32_0 = arith.constant 0 : i32
    %c0_i32_1 = arith.constant 0 : i32
    return %c0_i32, %c0_i32_0 : i32, i32
  }
  func.func @transform_7(%arg0: i32, %arg1: i32) -> (i32, i32) {
    %c0_i32 = arith.constant 0 : i32
    %c0_i32_0 = arith.constant 0 : i32
    %c0_i32_1 = arith.constant 0 : i32
    return %c0_i32, %c0_i32_0 : i32, i32
  }
  func.func @transform_8(%arg0: i32, %arg1: i32) -> (i32, i32) {
    %c0_i32 = arith.constant 0 : i32
    %c0_i32_0 = arith.constant 0 : i32
    %c0_i32_1 = arith.constant 0 : i32
    return %c0_i32, %c0_i32_0 : i32, i32
  }
  func.func @transform_9(%arg0: i32, %arg1: i32) -> (i32, i32) {
    %c0_i32 = arith.constant 0 : i32
    %c0_i32_0 = arith.constant 0 : i32
    %c0_i32_1 = arith.constant 0 : i32
    return %c0_i32, %c0_i32_0 : i32, i32
  }
  func.func @transform_10(%arg0: i32, %arg1: i32) -> (i32, i32, i32) {
    %c0_i32 = arith.constant 0 : i32
    %c0_i32_0 = arith.constant 0 : i32
    %c0_i32_1 = arith.constant 0 : i32
    return %arg0, %c0_i32, %c0_i32_0 : i32, i32, i32
  }
  func.func @transform_11(%arg0: i32, %arg1: i32) -> (i32, i32, i32) {
    %c0_i32 = arith.constant 0 : i32
    %c0_i32_0 = arith.constant 0 : i32
    %c0_i32_1 = arith.constant 0 : i32
    return %arg0, %c0_i32, %c0_i32_0 : i32, i32, i32
  }
  func.func @transform_12(%arg0: i32, %arg1: i32) -> (i32, i32, i32) {
    %c0_i32 = arith.constant 0 : i32
    %c0_i32_0 = arith.constant 0 : i32
    %c0_i32_1 = arith.constant 0 : i32
    return %arg0, %c0_i32, %c0_i32_0 : i32, i32, i32
  }
  func.func @transform_13(%arg0: i32, %arg1: i32) -> (i32, i32, i32) {
    %c0_i32 = arith.constant 0 : i32
    %c0_i32_0 = arith.constant 0 : i32
    %c0_i32_1 = arith.constant 0 : i32
    return %arg0, %c0_i32, %c0_i32_0 : i32, i32, i32
  }
  func.func @transform_14(%arg0: i32, %arg1: i32) -> (i32, i32, i32) {
    %c0_i32 = arith.constant 0 : i32
    %c0_i32_0 = arith.constant 0 : i32
    %c0_i32_1 = arith.constant 0 : i32
    return %arg0, %c0_i32, %c0_i32_0 : i32, i32, i32
  }
  func.func @transform_15(%arg0: i32, %arg1: i32) -> (i32, i32, i32) {
    %c0_i32 = arith.constant 0 : i32
    %c0_i32_0 = arith.constant 0 : i32
    %c0_i32_1 = arith.constant 0 : i32
    return %arg0, %c0_i32, %c0_i32_0 : i32, i32, i32
  }
}

</mosaic_0001>

<llo_original>
// kernel: tpu_custom_call.1
$region0: #{tpu_custom_call.1}
  #allocation0 [shape = 'u32[]', space=smem, size = 0x4, offset = 0x4, fixed_abs, tag = 'smem constant byte address 0x4 - core index']
  #allocation1 [shape = 'u32[144,128]{1,0:T(1,128)}', space=vmem, size = 0x12000, scoped, tag = 'internal scratch']
  #allocation2 [shape = 'f32[1,32]{1,0:T(1,128)}', space=vmem, size = 0x200, scoped, tag = 'scratch operand']
  %s0 = inlined_call_operand.vmem [shape: f32[2,4,2048], index: 0, kind: input, shape index: {}]
  %s1 = inlined_call_operand.vmem [shape: f32[4,32,1], index: 1, kind: input, shape index: {}]
  %s2 = inlined_call_operand.vmem [shape: f32[32,1], index: 2, kind: input, shape index: {}]
  %s3 = inlined_call_operand.hbm [shape: f32[32,256], index: 3, kind: input, shape index: {}]
  %s4 = inlined_call_operand.vmem [shape: f32[1,256], index: 4, kind: input, shape index: {}]
  %s5 = inlined_call_operand.vmem [shape: f32[2,4,128], index: 5, kind: input, shape index: {}]
  %s6 = inlined_call_operand.hbm [shape: f32[128,128], index: 6, kind: input, shape index: {}]
  %s7 = inlined_call_operand.vmem [shape: f32[1,128], index: 7, kind: input, shape index: {}]
  %s8 = inlined_call_operand.hbm [shape: f32[128,128], index: 8, kind: input, shape index: {}]
  %s9 = inlined_call_operand.vmem [shape: f32[1,128], index: 9, kind: input, shape index: {}]
  %s10 = inlined_call_operand.hbm [shape: f32[2,1,128], index: 10, kind: output, shape index: {0}]
  %s11 = inlined_call_operand.hbm [shape: f32[2,1,128], index: 11, kind: output, shape index: {1}]
  %s12 = inlined_call_operand.hbm [shape: f32[2,4,128], index: 12, kind: output, shape index: {2}]
  %s13 = inlined_call_operand.hbm [shape: f32[2,4,128], index: 13, kind: output, shape index: {3}]
  %s14 = inlined_call_operand.hbm [shape: f32[2,4,128], index: 14, kind: output, shape index: {4}]
  %s15 = inlined_call_operand.hbm [shape: f32[2,1,128], index: 15, kind: output, shape index: {5}]
  %16 = xla_tuple %s10, %s11, %s12, %s13, %s14, %s15
  %s17 = sld [smem:[#allocation0]]
  $region133: #{tpu_custom_call.1} parent=0
    _
  %s19 = ssub.s32 1, %s17
  %s20 = scalar_select 0, %s19, %s17
  $region1: #{tpu_custom_call.1} parent=0
    #allocation3 [shape = 'u8[32768]{0}', space=vmem, size = 0x8000, scoped, tag = 'input window, operand 3, single buffered']
    #allocation4 [shape = 's32[2]{0}', space=sflag, size = 0x8, scoped, tag = 'scoped memory for tpu_custom_call.1']
    #allocation5 [shape = 's32[2]{0}', space=sflag, size = 0x8, scoped, tag = 'scoped memory for tpu_custom_call.1']
    #allocation6 [shape = 'u8[65536]{0}', space=vmem, size = 0x10000, scoped, tag = 'input window, operand 6, single buffered']
    #allocation7 [shape = 's32[1]{0}', space=sflag, size = 0x4, scoped, tag = 'scoped memory for tpu_custom_call.1']
    #allocation8 [shape = 'u8[65536]{0}', space=vmem, size = 0x10000, scoped, tag = 'input window, operand 8, single buffered']
    #allocation9 [shape = 'u8[1024]{0}', space=vmem, size = 0x400, scoped, tag = 'output window, operand 0']
    #allocation10 [shape = 'u8[1024]{0}', space=vmem, size = 0x400, scoped, tag = 'output window, operand 1']
    #allocation11 [shape = 's32[2]{0}', space=sflag, size = 0x8, scoped, tag = 'scoped memory for tpu_custom_call.1']
    #allocation12 [shape = 'u8[4096]{0}', space=vmem, size = 0x1000, scoped, tag = 'output window, operand 2']
    #allocation13 [shape = 'u8[4096]{0}', space=vmem, size = 0x1000, scoped, tag = 'output window, operand 3']
    #allocation14 [shape = 's32[2]{0}', space=sflag, size = 0x8, scoped, tag = 'scoped memory for tpu_custom_call.1']
    #allocation15 [shape = 'u8[4096]{0}', space=vmem, size = 0x1000, scoped, tag = 'output window, operand 4']
    #allocation16 [shape = 'u8[1024]{0}', space=vmem, size = 0x400, scoped, tag = 'output window, operand 5']
    #allocation17 [shape = 's32[2]{0}', space=sflag, size = 0x8, scoped, tag = 'scoped memory for tpu_custom_call.1']
    %21 = vsyncpa [#allocation4], 0
    %22 = vsyncpa [#allocation7], 0
    %23 = vsyncpa [#allocation5], 0
    %s24 = scalar_lea.sflag [#allocation5], 1
    %25 = vsyncpa %s24, 0
    %26 = vsyncpa [#allocation11], 0
    %s27 = scalar_lea.sflag [#allocation11], 1
    %28 = vsyncpa %s27, 0
    %29 = vsyncpa [#allocation14], 0
    %s30 = scalar_lea.sflag [#allocation14], 1
    %31 = vsyncpa %s30, 0
    %32 = vsyncpa [#allocation17], 0
    %s33 = scalar_lea.sflag [#allocation17], 1
    %34 = vsyncpa %s33, 0
    loop: start=0, step=1, limit=6
    $region2: #{tpu_custom_call.1} parent=1 // loop_pre_header
      _
    $region3: #{tpu_custom_call.1} parent=1 // loop_header
      %s36 = sphi 0, %s40
      %p37 = scmp.ge.s32.totalorder %s36, 6
      %s43 = sphi 0, %s55
      %s44 = sphi 0, %s51
      %s45 = sphi 0, %s43
      %s46 = sphi 0, %s44
      %s47 = sphi 0, %s45
      %s48 = sphi 0, %s46
      %s60 = sphi 0, %s62
      %s63 = sphi 0, %s60
      %s64 = sphi 0, %s63
      %s80 = sphi 0, %s64
      %s84 = sphi 0, %s84
      %s86 = sphi 0, %s84
      %s87 = sphi 0, %s86
      %s101 = sphi 0, %s87
      %s105 = sphi 0, %s105
      %s107 = sphi 0, %s105
      %s108 = sphi 0, %s107
      %s122 = sphi 0, %s108
      %s126 = sphi 0, %s126
      %s128 = sphi 0, %s126
      %s129 = sphi 0, %s128
      %s143 = sphi 0, %s129
      %s147 = sphi 0, %s147
      %s149 = sphi 0, %s147
      %s150 = sphi 0, %s149
      %s164 = sphi 0, %s150
      %s170 = sphi 0, %s172
      %s173 = sphi 0, %s170
      %s174 = sphi 0, %s173
      %s190 = sphi 0, %s174
      %s194 = sphi 0, %s194
      %s196 = sphi 0, %s194
      %s197 = sphi 0, %s196
      %s211 = sphi 0, %s197
      %s215 = sphi 0, %s215
      %s217 = sphi 0, %s215
      %s218 = sphi 0, %s217
      %s232 = sphi 0, %s218
      %s236 = sphi 0, %s236
      %s238 = sphi 0, %s236
      %s239 = sphi 0, %s238
      %s253 = sphi 0, %s239
      %s257 = sphi 0, %s257
      %s259 = sphi 0, %s257
      %s260 = sphi 0, %s259
      %s274 = sphi 0, %s260
      %s280 = sphi 0, %s282
      %s283 = sphi 0, %s280
      %s284 = sphi 0, %s283
      %s300 = sphi 0, %s284
      %s306 = sphi 0, %s308
      %s309 = sphi 0, %s306
      %s310 = sphi 0, %s309
      %s326 = sphi 0, %s310
      %s332 = sphi 0, %s334
      %s335 = sphi 0, %s332
      %s336 = sphi 0, %s335
      %s352 = sphi 0, %s336
      %s358 = sphi 0, %s360
      %s361 = sphi 0, %s358
      %s362 = sphi 0, %s361
      %s378 = sphi 0, %s362
      %s384 = sphi 0, %s386
      %s387 = sphi 0, %s384
      %s388 = sphi 0, %s387
      %s404 = sphi 0, %s388
      %s410 = sphi 0, %s412
      %s413 = sphi 0, %s410
      %s414 = sphi 0, %s413
      %s430 = sphi 0, %s414
    $region4: #{tpu_custom_call.1} parent=1 // loop_header_branch
      %39 = sbr.rel (%p37) target = $region8
    $region5: #{tpu_custom_call.1} parent=1 // loop_body
      %s41 = ssub.s32 %s36, 1
      %s42 = ssub.s32 %s36, 2
      %s49 = sadd.s32 1, %s44
      %p50 = scmp.ge.s32.totalorder %s49, 2
      %s51 = scalar_select %p50, 0, %s49
      %s52 = sadd.s32 1, %s43
      %s53 = scalar_select %p50, %s52, %s43
      %p54 = scmp.ge.s32.totalorder %s53, 2
      %s55 = scalar_select %p54, 0, %s53
      %s56 = ssub.s32 %s43, %s55
      %s57 = ssub.s32 %s44, %s51
      %s58 = sor.u32 %s56, %s57
      %p59 = scmp.eq.s32.totalorder %s58, 0
      %s61 = sadd.s32 %s60, 1
      %s62 = scalar_select %p59, %s60, %s61
      %p65 = pneg %p59
      %p66 = scmp.eq.s32.totalorder %s36, 3
      %p67 = por %p65, %p66
      %p68 = scmp.ne.s32.totalorder %s60, %s63
      %p69 = scmp.eq.s32.totalorder %s36, 0
      %p70 = por %p68, %p69
      %p71 = scmp.ne.s32.totalorder %s60, %s63
      %p72 = scmp.eq.s32.totalorder %s41, 3
      %p73 = por %p71, %p72
      %p74 = scmp.ne.s32.totalorder %s63, %s64
      %p75 = scmp.eq.s32.totalorder %s41, 0
      %p76 = por %p74, %p75
      %p77 = scmp.ne.s32.totalorder %s63, %s64
      %p78 = scmp.eq.s32.totalorder %s42, 3
      %p79 = por %p77, %p78
      %p81 = scmp.ne.s32.totalorder %s64, %s80
      %p82 = scmp.eq.s32.totalorder %s42, 0
      %p83 = por %p81, %p82
      %s85 = sadd.s32 %s84, 1
      %p88 = scmp.eq.s32.totalorder %s36, 3
      %p89 = scmp.ne.s32.totalorder %s84, %s86
      %p90 = scmp.eq.s32.totalorder %s36, 0
      %p91 = por %p89, %p90
      %p92 = scmp.ne.s32.totalorder %s84, %s86
      %p93 = scmp.eq.s32.totalorder %s41, 3
      %p94 = por %p92, %p93
      %p95 = scmp.ne.s32.totalorder %s86, %s87
      %p96 = scmp.eq.s32.totalorder %s41, 0
      %p97 = por %p95, %p96
      %p98 = scmp.ne.s32.totalorder %s86, %s87
      %p99 = scmp.eq.s32.totalorder %s42, 3
      %p100 = por %p98, %p99
      %p102 = scmp.ne.s32.totalorder %s87, %s101
      %p103 = scmp.eq.s32.totalorder %s42, 0
      %p104 = por %p102, %p103
      %s106 = sadd.s32 %s105, 1
      %p109 = scmp.eq.s32.totalorder %s36, 3
      %p110 = scmp.ne.s32.totalorder %s105, %s107
      %p111 = scmp.eq.s32.totalorder %s36, 0
      %p112 = por %p110, %p111
      %p113 = scmp.ne.s32.totalorder %s105, %s107
      %p114 = scmp.eq.s32.totalorder %s41, 3
      %p115 = por %p113, %p114
      %p116 = scmp.ne.s32.totalorder %s107, %s108
      %p117 = scmp.eq.s32.totalorder %s41, 0
      %p118 = por %p116, %p117
      %p119 = scmp.ne.s32.totalorder %s107, %s108
      %p120 = scmp.eq.s32.totalorder %s42, 3
      %p121 = por %p119, %p120
      %p123 = scmp.ne.s32.totalorder %s108, %s122
      %p124 = scmp.eq.s32.totalorder %s42, 0
      %p125 = por %p123, %p124
      %s127 = sadd.s32 %s126, 1
      %p130 = scmp.eq.s32.totalorder %s36, 3
      %p131 = scmp.ne.s32.totalorder %s126, %s128
      %p132 = scmp.eq.s32.totalorder %s36, 0
      %p133 = por %p131, %p132
      %p134 = scmp.ne.s32.totalorder %s126, %s128
      %p135 = scmp.eq.s32.totalorder %s41, 3
      %p136 = por %p134, %p135
      %p137 = scmp.ne.s32.totalorder %s128, %s129
      %p138 = scmp.eq.s32.totalorder %s41, 0
      %p139 = por %p137, %p138
      %p140 = scmp.ne.s32.totalorder %s128, %s129
      %p141 = scmp.eq.s32.totalorder %s42, 3
      %p142 = por %p140, %p141
      %p144 = scmp.ne.s32.totalorder %s129, %s143
      %p145 = scmp.eq.s32.totalorder %s42, 0
      %p146 = por %p144, %p145
      %s148 = sadd.s32 %s147, 1
      %p151 = scmp.eq.s32.totalorder %s36, 3
      %p152 = scmp.ne.s32.totalorder %s147, %s149
      %p153 = scmp.eq.s32.totalorder %s36, 0
      %p154 = por %p152, %p153
      %p155 = scmp.ne.s32.totalorder %s147, %s149
      %p156 = scmp.eq.s32.totalorder %s41, 3
      %p157 = por %p155, %p156
      %p158 = scmp.ne.s32.totalorder %s149, %s150
      %p159 = scmp.eq.s32.totalorder %s41, 0
      %p160 = por %p158, %p159
      %p161 = scmp.ne.s32.totalorder %s149, %s150
      %p162 = scmp.eq.s32.totalorder %s42, 3
      %p163 = por %p161, %p162
      %p165 = scmp.ne.s32.totalorder %s150, %s164
      %p166 = scmp.eq.s32.totalorder %s42, 0
      %p167 = por %p165, %p166
      %s168 = ssub.s32 %s43, %s55
      %p169 = scmp.eq.s32.totalorder %s168, 0
      %s171 = sadd.s32 %s170, 1
      %s172 = scalar_select %p169, %s170, %s171
      %p175 = pneg %p169
      %p176 = scmp.eq.s32.totalorder %s36, 3
      %p177 = por %p175, %p176
      %p178 = scmp.ne.s32.totalorder %s170, %s173
      %p179 = scmp.eq.s32.totalorder %s36, 0
      %p180 = por %p178, %p179
      %p181 = scmp.ne.s32.totalorder %s170, %s173
      %p182 = scmp.eq.s32.totalorder %s41, 3
      %p183 = por %p181, %p182
      %p184 = scmp.ne.s32.totalorder %s173, %s174
      %p185 = scmp.eq.s32.totalorder %s41, 0
      %p186 = por %p184, %p185
      %p187 = scmp.ne.s32.totalorder %s173, %s174
      %p188 = scmp.eq.s32.totalorder %s42, 3
      %p189 = por %p187, %p188
      %p191 = scmp.ne.s32.totalorder %s174, %s190
      %p192 = scmp.eq.s32.totalorder %s42, 0
      %p193 = por %p191, %p192
      %s195 = sadd.s32 %s194, 1
      %p198 = scmp.eq.s32.totalorder %s36, 3
      %p199 = scmp.ne.s32.totalorder %s194, %s196
      %p200 = scmp.eq.s32.totalorder %s36, 0
      %p201 = por %p199, %p200
      %p202 = scmp.ne.s32.totalorder %s194, %s196
      %p203 = scmp.eq.s32.totalorder %s41, 3
      %p204 = por %p202, %p203
      %p205 = scmp.ne.s32.totalorder %s196, %s197
      %p206 = scmp.eq.s32.totalorder %s41, 0
      %p207 = por %p205, %p206
      %p208 = scmp.ne.s32.totalorder %s196, %s197
      %p209 = scmp.eq.s32.totalorder %s42, 3
      %p210 = por %p208, %p209
      %p212 = scmp.ne.s32.totalorder %s197, %s211
      %p213 = scmp.eq.s32.totalorder %s42, 0
      %p214 = por %p212, %p213
      %s216 = sadd.s32 %s215, 1
      %p219 = scmp.eq.s32.totalorder %s36, 3
      %p220 = scmp.ne.s32.totalorder %s215, %s217
      %p221 = scmp.eq.s32.totalorder %s36, 0
      %p222 = por %p220, %p221
      %p223 = scmp.ne.s32.totalorder %s215, %s217
      %p224 = scmp.eq.s32.totalorder %s41, 3
      %p225 = por %p223, %p224
      %p226 = scmp.ne.s32.totalorder %s217, %s218
      %p227 = scmp.eq.s32.totalorder %s41, 0
      %p228 = por %p226, %p227
      %p229 = scmp.ne.s32.totalorder %s217, %s218
      %p230 = scmp.eq.s32.totalorder %s42, 3
      %p231 = por %p229, %p230
      %p233 = scmp.ne.s32.totalorder %s218, %s232
      %p234 = scmp.eq.s32.totalorder %s42, 0
      %p235 = por %p233, %p234
      %s237 = sadd.s32 %s236, 1
      %p240 = scmp.eq.s32.totalorder %s36, 3
      %p241 = scmp.ne.s32.totalorder %s236, %s238
      %p242 = scmp.eq.s32.totalorder %s36, 0
      %p243 = por %p241, %p242
      %p244 = scmp.ne.s32.totalorder %s236, %s238
      %p245 = scmp.eq.s32.totalorder %s41, 3
      %p246 = por %p244, %p245
      %p247 = scmp.ne.s32.totalorder %s238, %s239
      %p248 = scmp.eq.s32.totalorder %s41, 0
      %p249 = por %p247, %p248
      %p250 = scmp.ne.s32.totalorder %s238, %s239
      %p251 = scmp.eq.s32.totalorder %s42, 3
      %p252 = por %p250, %p251
      %p254 = scmp.ne.s32.totalorder %s239, %s253
      %p255 = scmp.eq.s32.totalorder %s42, 0
      %p256 = por %p254, %p255
      %s258 = sadd.s32 %s257, 1
      %p261 = scmp.eq.s32.totalorder %s36, 3
      %p262 = scmp.ne.s32.totalorder %s257, %s259
      %p263 = scmp.eq.s32.totalorder %s36, 0
      %p264 = por %p262, %p263
      %p265 = scmp.ne.s32.totalorder %s257, %s259
      %p266 = scmp.eq.s32.totalorder %s41, 3
      %p267 = por %p265, %p266
      %p268 = scmp.ne.s32.totalorder %s259, %s260
      %p269 = scmp.eq.s32.totalorder %s41, 0
      %p270 = por %p268, %p269
      %p271 = scmp.ne.s32.totalorder %s259, %s260
      %p272 = scmp.eq.s32.totalorder %s42, 3
      %p273 = por %p271, %p272
      %p275 = scmp.ne.s32.totalorder %s260, %s274
      %p276 = scmp.eq.s32.totalorder %s42, 0
      %p277 = por %p275, %p276
      %s278 = ssub.s32 %s43, %s55
      %p279 = scmp.eq.s32.totalorder %s278, 0
      %s281 = sadd.s32 %s280, 1
      %s282 = scalar_select %p279, %s280, %s281
      %p285 = pneg %p279
      %p286 = scmp.eq.s32.totalorder %s36, 3
      %p287 = por %p285, %p286
      %p288 = scmp.ne.s32.totalorder %s280, %s283
      %p289 = scmp.eq.s32.totalorder %s36, 0
      %p290 = por %p288, %p289
      %p291 = scmp.ne.s32.totalorder %s280, %s283
      %p292 = scmp.eq.s32.totalorder %s41, 3
      %p293 = por %p291, %p292
      %p294 = scmp.ne.s32.totalorder %s283, %s284
      %p295 = scmp.eq.s32.totalorder %s41, 0
      %p296 = por %p294, %p295
      %p297 = scmp.ne.s32.totalorder %s283, %s284
      %p298 = scmp.eq.s32.totalorder %s42, 3
      %p299 = por %p297, %p298
      %p301 = scmp.ne.s32.totalorder %s284, %s300
      %p302 = scmp.eq.s32.totalorder %s42, 0
      %p303 = por %p301, %p302
      %s304 = ssub.s32 %s43, %s55
      %p305 = scmp.eq.s32.totalorder %s304, 0
      %s307 = sadd.s32 %s306, 1
      %s308 = scalar_select %p305, %s306, %s307
      %p311 = pneg %p305
      %p312 = scmp.eq.s32.totalorder %s36, 3
      %p313 = por %p311, %p312
      %p314 = scmp.ne.s32.totalorder %s306, %s309
      %p315 = scmp.eq.s32.totalorder %s36, 0
      %p316 = por %p314, %p315
      %p317 = scmp.ne.s32.totalorder %s306, %s309
      %p318 = scmp.eq.s32.totalorder %s41, 3
      %p319 = por %p317, %p318
      %p320 = scmp.ne.s32.totalorder %s309, %s310
      %p321 = scmp.eq.s32.totalorder %s41, 0
      %p322 = por %p320, %p321
      %p323 = scmp.ne.s32.totalorder %s309, %s310
      %p324 = scmp.eq.s32.totalorder %s42, 3
      %p325 = por %p323, %p324
      %p327 = scmp.ne.s32.totalorder %s310, %s326
      %p328 = scmp.eq.s32.totalorder %s42, 0
      %p329 = por %p327, %p328
      %s330 = ssub.s32 %s43, %s55
      %p331 = scmp.eq.s32.totalorder %s330, 0
      %s333 = sadd.s32 %s332, 1
      %s334 = scalar_select %p331, %s332, %s333
      %p337 = pneg %p331
      %p338 = scmp.eq.s32.totalorder %s36, 3
      %p339 = por %p337, %p338
      %p340 = scmp.ne.s32.totalorder %s332, %s335
      %p341 = scmp.eq.s32.totalorder %s36, 0
      %p342 = por %p340, %p341
      %p343 = scmp.ne.s32.totalorder %s332, %s335
      %p344 = scmp.eq.s32.totalorder %s41, 3
      %p345 = por %p343, %p344
      %p346 = scmp.ne.s32.totalorder %s335, %s336
      %p347 = scmp.eq.s32.totalorder %s41, 0
      %p348 = por %p346, %p347
      %p349 = scmp.ne.s32.totalorder %s335, %s336
      %p350 = scmp.eq.s32.totalorder %s42, 3
      %p351 = por %p349, %p350
      %p353 = scmp.ne.s32.totalorder %s336, %s352
      %p354 = scmp.eq.s32.totalorder %s42, 0
      %p355 = por %p353, %p354
      %s356 = ssub.s32 %s43, %s55
      %p357 = scmp.eq.s32.totalorder %s356, 0
      %s359 = sadd.s32 %s358, 1
      %s360 = scalar_select %p357, %s358, %s359
      %p363 = pneg %p357
      %p364 = scmp.eq.s32.totalorder %s36, 3
      %p365 = por %p363, %p364
      %p366 = scmp.ne.s32.totalorder %s358, %s361
      %p367 = scmp.eq.s32.totalorder %s36, 0
      %p368 = por %p366, %p367
      %p369 = scmp.ne.s32.totalorder %s358, %s361
      %p370 = scmp.eq.s32.totalorder %s41, 3
      %p371 = por %p369, %p370
      %p372 = scmp.ne.s32.totalorder %s361, %s362
      %p373 = scmp.eq.s32.totalorder %s41, 0
      %p374 = por %p372, %p373
      %p375 = scmp.ne.s32.totalorder %s361, %s362
      %p376 = scmp.eq.s32.totalorder %s42, 3
      %p377 = por %p375, %p376
      %p379 = scmp.ne.s32.totalorder %s362, %s378
      %p380 = scmp.eq.s32.totalorder %s42, 0
      %p381 = por %p379, %p380
      %s382 = ssub.s32 %s43, %s55
      %p383 = scmp.eq.s32.totalorder %s382, 0
      %s385 = sadd.s32 %s384, 1
      %s386 = scalar_select %p383, %s384, %s385
      %p389 = pneg %p383
      %p390 = scmp.eq.s32.totalorder %s36, 3
      %p391 = por %p389, %p390
      %p392 = scmp.ne.s32.totalorder %s384, %s387
      %p393 = scmp.eq.s32.totalorder %s36, 0
      %p394 = por %p392, %p393
      %p395 = scmp.ne.s32.totalorder %s384, %s387
      %p396 = scmp.eq.s32.totalorder %s41, 3
      %p397 = por %p395, %p396
      %p398 = scmp.ne.s32.totalorder %s387, %s388
      %p399 = scmp.eq.s32.totalorder %s41, 0
      %p400 = por %p398, %p399
      %p401 = scmp.ne.s32.totalorder %s387, %s388
      %p402 = scmp.eq.s32.totalorder %s42, 3
      %p403 = por %p401, %p402
      %p405 = scmp.ne.s32.totalorder %s388, %s404
      %p406 = scmp.eq.s32.totalorder %s42, 0
      %p407 = por %p405, %p406
      %s408 = ssub.s32 %s43, %s55
      %p409 = scmp.eq.s32.totalorder %s408, 0
      %s411 = sadd.s32 %s410, 1
      %s412 = scalar_select %p409, %s410, %s411
      %p415 = pneg %p409
      %p416 = scmp.eq.s32.totalorder %s36, 3
      %p417 = por %p415, %p416
      %p418 = scmp.ne.s32.totalorder %s410, %s413
      %p419 = scmp.eq.s32.totalorder %s36, 0
      %p420 = por %p418, %p419
      %p421 = scmp.ne.s32.totalorder %s410, %s413
      %p422 = scmp.eq.s32.totalorder %s41, 3
      %p423 = por %p421, %p422
      %p424 = scmp.ne.s32.totalorder %s413, %s414
      %p425 = scmp.eq.s32.totalorder %s41, 0
      %p426 = por %p424, %p425
      %p427 = scmp.ne.s32.totalorder %s413, %s414
      %p428 = scmp.eq.s32.totalorder %s42, 3
      %p429 = por %p427, %p428
      %p431 = scmp.ne.s32.totalorder %s414, %s430
      %p432 = scmp.eq.s32.totalorder %s42, 0
      %p433 = por %p431, %p432
      %p434 = scmp.le.s32.totalorder 1, %s36
      %p435 = scmp.lt.s32.totalorder %s36, 5
      %p436 = pnand %p434, %p435
      %p437 = pneg %p436
      // Predicated region
      $region9: #{tpu_custom_call.1} parent=5 // pred_check
        _
      $region10: #{tpu_custom_call.1} parent=5 // pred_check_branch
        %439 = sbr.rel (%p436) target = $region12
      $region11: #{tpu_custom_call.1} parent=5 // pred_region
        %s440 = ssub.s32 %s36, 1
        // Predicated region
        $region13: #{tpu_custom_call.1} parent=11 // pred_check
          %p441 = pneg %p97
        $region14: #{tpu_custom_call.1} parent=11 // pred_check_branch
          %443 = sbr.rel (%p441) target = $region16
        $region15: #{tpu_custom_call.1} parent=11 // pred_region
          _
        $region16: #{tpu_custom_call.1} parent=11 // pred_fallthru
          _
        // Predicated region
        $region17: #{tpu_custom_call.1} parent=11 // pred_check
          %p444 = pneg %p118
        $region18: #{tpu_custom_call.1} parent=11 // pred_check_branch
          %446 = sbr.rel (%p444) target = $region20
        $region19: #{tpu_custom_call.1} parent=11 // pred_region
          _
        $region20: #{tpu_custom_call.1} parent=11 // pred_fallthru
          _
        // Predicated region
        $region21: #{tpu_custom_call.1} parent=11 // pred_check
          %p447 = pneg %p139
        $region22: #{tpu_custom_call.1} parent=11 // pred_check_branch
          %449 = sbr.rel (%p447) target = $region24
        $region23: #{tpu_custom_call.1} parent=11 // pred_region
          %s451 = ssub.s32 1024, 1024
          %452 = vsyncadd [#allocation4], %s451
          %s453 = sshll.u32 [#allocation3], 4
          %s454 = int_to_ptr.vmem [resolvable:$true] %s453
          %459 = dma.hbm_to_vmem [thread:$0]  %s3, 1024, %s454, [#allocation4], 256, 256, 16
        $region24: #{tpu_custom_call.1} parent=11 // pred_fallthru
          _
        // Predicated region
        $region25: #{tpu_custom_call.1} parent=11 // pred_check
          %p460 = pneg %p160
        $region26: #{tpu_custom_call.1} parent=11 // pred_check_branch
          %462 = sbr.rel (%p460) target = $region28
        $region27: #{tpu_custom_call.1} parent=11 // pred_region
          _
        $region28: #{tpu_custom_call.1} parent=11 // pred_fallthru
          _
        // Predicated region
        $region29: #{tpu_custom_call.1} parent=11 // pred_check
          %p463 = pneg %p207
        $region30: #{tpu_custom_call.1} parent=11 // pred_check_branch
          %465 = sbr.rel (%p463) target = $region32
        $region31: #{tpu_custom_call.1} parent=11 // pred_region
          %s467 = ssub.s32 2048, 2048
          %468 = vsyncadd [#allocation7], %s467
          %s469 = sshll.u32 [#allocation6], 4
          %s470 = int_to_ptr.vmem [resolvable:$true] %s469
          %475 = dma.hbm_to_vmem [thread:$0]  %s6, 2048, %s470, [#allocation7], 128, 128, 8
        $region32: #{tpu_custom_call.1} parent=11 // pred_fallthru
          _
        // Predicated region
        $region33: #{tpu_custom_call.1} parent=11 // pred_check
          %p476 = pneg %p228
        $region34: #{tpu_custom_call.1} parent=11 // pred_check_branch
          %478 = sbr.rel (%p476) target = $region36
        $region35: #{tpu_custom_call.1} parent=11 // pred_region
          _
        $region36: #{tpu_custom_call.1} parent=11 // pred_fallthru
          _
        // Predicated region
        $region37: #{tpu_custom_call.1} parent=11 // pred_check
          %p479 = pneg %p249
        $region38: #{tpu_custom_call.1} parent=11 // pred_check_branch
          %481 = sbr.rel (%p479) target = $region40
        $region39: #{tpu_custom_call.1} parent=11 // pred_region
          %s483 = ssub.s32 2048, 2048
          %484 = vsyncadd [#allocation7], %s483
          %s485 = sshll.u32 [#allocation8], 4
          %s486 = int_to_ptr.vmem [resolvable:$true] %s485
          %491 = dma.hbm_to_vmem [thread:$0]  %s8, 2048, %s486, [#allocation7], 128, 128, 8
        $region40: #{tpu_custom_call.1} parent=11 // pred_fallthru
          _
        // Predicated region
        $region41: #{tpu_custom_call.1} parent=11 // pred_check
          %p492 = pneg %p270
        $region42: #{tpu_custom_call.1} parent=11 // pred_check_branch
          %494 = sbr.rel (%p492) target = $region44
        $region43: #{tpu_custom_call.1} parent=11 // pred_region
          _
        $region44: #{tpu_custom_call.1} parent=11 // pred_fallthru
          _
      $region12: #{tpu_custom_call.1} parent=5 // pred_fallthru
        _
      %p495 = scmp.lt.s32.totalorder %s36, 4
      // Predicated region
      $region45: #{tpu_custom_call.1} parent=5 // pred_check
        %p496 = pneg %p495
      $region46: #{tpu_custom_call.1} parent=5 // pred_check_branch
        %498 = sbr.rel (%p496) target = $region48
      $region47: #{tpu_custom_call.1} parent=5 // pred_region
        // Predicated region
        $region49: #{tpu_custom_call.1} parent=47 // pred_check
          %p499 = pneg %p70
        $region50: #{tpu_custom_call.1} parent=47 // pred_check_branch
          %501 = sbr.rel (%p499) target = $region52
        $region51: #{tpu_custom_call.1} parent=47 // pred_region
          %s502 = smul.u32 8, %s44
          %p503 = scmp.lt.s32.totalorder %s43, 1
          %s504 = scalar_select %p503, %s43, 1
          %p505 = scmp.lt.s32.totalorder %s502, 15
          %s506 = scalar_select %p505, %s502, 15
          %s507 = smul.addr %s504, 16
          %s508 = sadd.s32 %s506, %s507
          %s509 = smul.addr %s508, 4
          %s510 = scalar_lea.vmem %s0, %s509
          %s511 = smul.u32 8, %s44
        $region52: #{tpu_custom_call.1} parent=47 // pred_fallthru
          _
        // Predicated region
        $region53: #{tpu_custom_call.1} parent=47 // pred_check
          %p512 = pneg %p180
        $region54: #{tpu_custom_call.1} parent=47 // pred_check_branch
          %514 = sbr.rel (%p512) target = $region56
        $region55: #{tpu_custom_call.1} parent=47 // pred_region
          %p515 = scmp.lt.s32.totalorder %s43, 1
          %s516 = scalar_select %p515, %s43, 1
          %s517 = smul.addr %s516, 4
          %s518 = scalar_lea.vmem %s5, %s517
        $region56: #{tpu_custom_call.1} parent=47 // pred_fallthru
          _
      $region48: #{tpu_custom_call.1} parent=5 // pred_fallthru
        _
      %p519 = scmp.le.s32.totalorder 1, %s36
      %p520 = scmp.lt.s32.totalorder %s36, 5
      %p521 = pnand %p519, %p520
      %p522 = pneg %p521
      // Predicated region
      $region57: #{tpu_custom_call.1} parent=5 // pred_check
        _
      $region58: #{tpu_custom_call.1} parent=5 // pred_check_branch
        %524 = sbr.rel (%p521) target = $region60
      $region59: #{tpu_custom_call.1} parent=5 // pred_region
        %s525 = ssub.s32 %s36, 1
        // Predicated region
        $region61: #{tpu_custom_call.1} parent=59 // pred_check
          %p526 = pneg %p139
        $region62: #{tpu_custom_call.1} parent=59 // pred_check_branch
          %528 = sbr.rel (%p526) target = $region64
        $region63: #{tpu_custom_call.1} parent=59 // pred_region
          %529 = dma.done [#allocation4], 1024
        $region64: #{tpu_custom_call.1} parent=59 // pred_fallthru
          _
        // Predicated region
        $region65: #{tpu_custom_call.1} parent=59 // pred_check
          %p530 = pneg %p207
        $region66: #{tpu_custom_call.1} parent=59 // pred_check_branch
          %532 = sbr.rel (%p530) target = $region68
        $region67: #{tpu_custom_call.1} parent=59 // pred_region
          %533 = dma.done [#allocation7], 2048
        $region68: #{tpu_custom_call.1} parent=59 // pred_fallthru
          _
        // Predicated region
        $region69: #{tpu_custom_call.1} parent=59 // pred_check
          %p534 = pneg %p249
        $region70: #{tpu_custom_call.1} parent=59 // pred_check_branch
          %536 = sbr.rel (%p534) target = $region72
        $region71: #{tpu_custom_call.1} parent=59 // pred_region
          %537 = dma.done [#allocation7], 2048
        $region72: #{tpu_custom_call.1} parent=59 // pred_fallthru
          _
        %s538 = smul.u32 8, %s46
        %p539 = scmp.lt.s32.totalorder %s45, 1
        %s540 = scalar_select %p539, %s45, 1
        %p541 = scmp.lt.s32.totalorder %s538, 15
        %s542 = scalar_select %p541, %s538, 15
        %s543 = smul.addr %s540, 16
        %s544 = sadd.s32 %s542, %s543
        %s545 = smul.addr %s544, 4
        %s546 = scalar_lea.vmem %s0, %s545
        %p547 = pneg %p76
        %p548 = pneg %p73
        %p549 = pneg %p97
        %p550 = pneg %p94
        %p551 = pneg %p118
        %p552 = pneg %p115
        %p553 = pneg %p139
        %p554 = pneg %p136
        %p555 = pneg %p160
        %p556 = pneg %p157
        %p557 = scmp.lt.s32.totalorder %s45, 1
        %s558 = scalar_select %p557, %s45, 1
        %s559 = smul.addr %s558, 4
        %s560 = scalar_lea.vmem %s5, %s559
        %p561 = pneg %p186
        %p562 = pneg %p183
        %p563 = pneg %p207
        %p564 = pneg %p204
        %p565 = pneg %p228
        %p566 = pneg %p225
        %p567 = pneg %p249
        %p568 = pneg %p246
        %p569 = pneg %p270
        %p570 = pneg %p267
        %p571 = pneg %p296
        %p572 = pneg %p293
        %s573 = sand.u32 %s283, 1
        %s574 = scalar_lea.sflag [#allocation5], %s573
        %s575 = sand.u32 %s283, 1
        %s576 = scalar_lea.vmem [#allocation9], %s575
        %p577 = pneg %p322
        %p578 = pneg %p319
        %s579 = sand.u32 %s41, 1
        %s580 = scalar_lea.sflag [#allocation11], %s579
        %s581 = sand.u32 %s309, 1
        %s582 = scalar_lea.vmem [#allocation10], %s581
        %p583 = pneg %p348
        %p584 = pneg %p345
        %s585 = sand.u32 %s41, 1
        %s586 = scalar_lea.sflag [#allocation11], %s585
        %s587 = sand.u32 %s335, 1
        %s588 = smul.addr %s587, 4
        %s589 = scalar_lea.vmem [#allocation12], %s588
        %p590 = pneg %p374
        %p591 = pneg %p371
        %s592 = sand.u32 %s41, 1
        %s593 = scalar_lea.sflag [#allocation14], %s592
        %s594 = sand.u32 %s361, 1
        %s595 = smul.addr %s594, 4
        %s596 = scalar_lea.vmem [#allocation13], %s595
        %p597 = pneg %p400
        %p598 = pneg %p397
        %s599 = sand.u32 %s41, 1
        %s600 = scalar_lea.sflag [#allocation14], %s599
        %s601 = sand.u32 %s387, 1
        %s602 = smul.addr %s601, 4
        %s603 = scalar_lea.vmem [#allocation15], %s602
        %p604 = pneg %p426
        %p605 = pneg %p423
        %s606 = sand.u32 %s413, 1
        %s607 = scalar_lea.sflag [#allocation17], %s606
        %s608 = sand.u32 %s413, 1
        %s609 = scalar_lea.vmem [#allocation16], %s608
        %s610 = smul.u32 8, %s46
        %p611 = scmp.lt.s32.totalorder %s45, 1
        %s612 = scalar_select %p611, %s45, 1
        %p613 = scmp.lt.s32.totalorder %s610, 15
        %s614 = scalar_select %p613, %s610, 15
        %s615 = smul.addr %s612, 16
        %s616 = sadd.s32 %s614, %s615
        %s617 = smul.addr %s616, 4
        %s618 = scalar_lea.vmem %s0, %s617
        %s619 = smul.u32 8, %s46
        %p620 = scmp.lt.s32.totalorder %s45, 1
        %s621 = scalar_select %p620, %s45, 1
        %s622 = smul.addr %s621, 4
        %s623 = scalar_lea.vmem %s5, %s622
        %p624 = scmp.eq.s32.totalorder %s46, 0
        // Predicated region
        $region73: #{tpu_custom_call.1} parent=59 // pred_check
          %p625 = pneg %p624
        $region74: #{tpu_custom_call.1} parent=59 // pred_check_branch
          %627 = sbr.rel (%p625) target = $region76
        $region75: #{tpu_custom_call.1} parent=59 // pred_region
          %vm628 = vcmask 253952
          %629 = vst.msk [vmem:[#allocation2] sm:$0x1] %vm628, 0.0
        $region76: #{tpu_custom_call.1} parent=59 // pred_fallthru
          _
        %v630 = vld [vmem:[%s618] sm:$0xff]
        %v631 = vld [vmem:[%s618 + $0x8] sm:$0xff]
        %v632 = vld [vmem:[%s618 + $0x10] sm:$0xff]
        %v633 = vld [vmem:[%s618 + $0x18] sm:$0xff]
        %v634 = vld [vmem:[%s1] sm:$0xff]
        %v635 = vld [vmem:[%s1 + $0x8] sm:$0xff]
        %v636 = vld [vmem:[%s1 + $0x10] sm:$0xff]
        %v637 = vld [vmem:[%s1 + $0x18] sm:$0xff]
        %639 = vset.pattern.permute.xlu0 0
        %640 = vperm.xlu0 %639, %v634
        %v641 = vpop.permute.xlu0 %640
        %644 = vset.pattern.permute.xlu0 0
        %645 = vperm.xlu0 %644, %v635
        %v646 = vpop.permute.xlu0 %645
        %649 = vset.pattern.permute.xlu0 0
        %650 = vperm.xlu0 %649, %v636
        %v651 = vpop.permute.xlu0 %650
        %654 = vset.pattern.permute.xlu0 0
        %655 = vperm.xlu0 %654, %v637
        %v656 = vpop.permute.xlu0 %655
        %v662 = vlaneseq
        %v663 = vshrl.u32 %v662, 7
        %v664 = vsub.s32 0, %v663
        %v665 = vrot.slane %v630, %v664
        %v666 = vlaneseq
        %v667 = vshrl.u32 %v666, 7
        %v668 = vsub.s32 4, %v667
        %v669 = vrot.slane %v630, %v668
        %v670 = vlaneseq
        %v671 = vshrl.u32 %v670, 7
        %v672 = vsub.s32 0, %v671
        %v673 = vrot.slane %v631, %v672
        %v674 = vlaneseq
        %v675 = vshrl.u32 %v674, 7
        %v676 = vsub.s32 4, %v675
        %v677 = vrot.slane %v631, %v676
        %v678 = vlaneseq
        %v679 = vshrl.u32 %v678, 7
        %v680 = vsub.s32 0, %v679
        %v681 = vrot.slane %v632, %v680
        %v682 = vlaneseq
        %v683 = vshrl.u32 %v682, 7
        %v684 = vsub.s32 4, %v683
        %v685 = vrot.slane %v632, %v684
        %v686 = vlaneseq
        %v687 = vshrl.u32 %v686, 7
        %v688 = vsub.s32 0, %v687
        %v689 = vrot.slane %v633, %v688
        %v690 = vlaneseq
        %v691 = vshrl.u32 %v690, 7
        %v692 = vsub.s32 4, %v691
        %v693 = vrot.slane %v633, %v692
        %v702 = vlaneseq
        %v703 = vshrl.u32 %v702, 7
        %v704 = vsub.s32 0, %v703
        %v705 = vrot.slane %v665, %v704
        %v706 = vlaneseq
        %v707 = vshrl.u32 %v706, 7
        %v708 = vsub.s32 0, %v707
        %v709 = vrot.slane %v669, %v708
        %v710 = vlaneseq
        %v711 = vshrl.u32 %v710, 7
        %v712 = vsub.s32 0, %v711
        %v713 = vrot.slane %v673, %v712
        %v714 = vlaneseq
        %v715 = vshrl.u32 %v714, 7
        %v716 = vsub.s32 0, %v715
        %v717 = vrot.slane %v677, %v716
        %v718 = vlaneseq
        %v719 = vshrl.u32 %v718, 7
        %v720 = vsub.s32 0, %v719
        %v721 = vrot.slane %v681, %v720
        %v722 = vlaneseq
        %v723 = vshrl.u32 %v722, 7
        %v724 = vsub.s32 0, %v723
        %v725 = vrot.slane %v685, %v724
        %v726 = vlaneseq
        %v727 = vshrl.u32 %v726, 7
        %v728 = vsub.s32 0, %v727
        %v729 = vrot.slane %v689, %v728
        %v730 = vlaneseq
        %v731 = vshrl.u32 %v730, 7
        %v732 = vsub.s32 0, %v731
        %v733 = vrot.slane %v693, %v732
        %v734 = vmul.f32 %v641, %v705
        %v735 = vmul.f32 %v641, %v709
        %v736 = vmul.f32 %v641, %v713
        %v737 = vmul.f32 %v641, %v717
        %v738 = vmul.f32 %v641, %v721
        %v739 = vmul.f32 %v641, %v725
        %v740 = vmul.f32 %v641, %v729
        %v741 = vmul.f32 %v641, %v733
        %v742 = vmul.f32 %v646, %v705
        %v743 = vmul.f32 %v646, %v709
        %v744 = vmul.f32 %v646, %v713
        %v745 = vmul.f32 %v646, %v717
        %v746 = vmul.f32 %v646, %v721
        %v747 = vmul.f32 %v646, %v725
        %v748 = vmul.f32 %v646, %v729
        %v749 = vmul.f32 %v646, %v733
        %v750 = vmul.f32 %v651, %v705
        %v751 = vmul.f32 %v651, %v709
        %v752 = vmul.f32 %v651, %v713
        %v753 = vmul.f32 %v651, %v717
        %v754 = vmul.f32 %v651, %v721
        %v755 = vmul.f32 %v651, %v725
        %v756 = vmul.f32 %v651, %v729
        %v757 = vmul.f32 %v651, %v733
        %v758 = vmul.f32 %v656, %v705
        %v759 = vmul.f32 %v656, %v709
        %v760 = vmul.f32 %v656, %v713
        %v761 = vmul.f32 %v656, %v717
        %v762 = vmul.f32 %v656, %v721
        %v763 = vmul.f32 %v656, %v725
        %v764 = vmul.f32 %v656, %v729
        %v765 = vmul.f32 %v656, %v733
        %s766 = scalar_lea.vmem %s1, 32
        %v767 = vld [vmem:[%s766] sm:$0xff]
        %v768 = vld [vmem:[%s766 + $0x8] sm:$0xff]
        %v769 = vld [vmem:[%s766 + $0x10] sm:$0xff]
        %v770 = vld [vmem:[%s766 + $0x18] sm:$0xff]
        %772 = vset.pattern.permute.xlu0 0
        %773 = vperm.xlu0 %772, %v767
        %v774 = vpop.permute.xlu0 %773
        %777 = vset.pattern.permute.xlu0 0
        %778 = vperm.xlu0 %777, %v768
        %v779 = vpop.permute.xlu0 %778
        %782 = vset.pattern.permute.xlu0 0
        %783 = vperm.xlu0 %782, %v769
        %v784 = vpop.permute.xlu0 %783
        %787 = vset.pattern.permute.xlu0 0
        %788 = vperm.xlu0 %787, %v770
        %v789 = vpop.permute.xlu0 %788
        %v791 = vlaneseq
        %v792 = vshrl.u32 %v791, 7
        %v793 = vsub.s32 1, %v792
        %v794 = vrot.slane %v630, %v793
        %v795 = vlaneseq
        %v796 = vshrl.u32 %v795, 7
        %v797 = vsub.s32 5, %v796
        %v798 = vrot.slane %v630, %v797
        %v799 = vlaneseq
        %v800 = vshrl.u32 %v799, 7
        %v801 = vsub.s32 1, %v800
        %v802 = vrot.slane %v631, %v801
        %v803 = vlaneseq
        %v804 = vshrl.u32 %v803, 7
        %v805 = vsub.s32 5, %v804
        %v806 = vrot.slane %v631, %v805
        %v807 = vlaneseq
        %v808 = vshrl.u32 %v807, 7
        %v809 = vsub.s32 1, %v808
        %v810 = vrot.slane %v632, %v809
        %v811 = vlaneseq
        %v812 = vshrl.u32 %v811, 7
        %v813 = vsub.s32 5, %v812
        %v814 = vrot.slane %v632, %v813
        %v815 = vlaneseq
        %v816 = vshrl.u32 %v815, 7
        %v817 = vsub.s32 1, %v816
        %v818 = vrot.slane %v633, %v817
        %v819 = vlaneseq
        %v820 = vshrl.u32 %v819, 7
        %v821 = vsub.s32 5, %v820
        %v822 = vrot.slane %v633, %v821
        %v831 = vlaneseq
        %v832 = vshrl.u32 %v831, 7
        %v833 = vsub.s32 1, %v832
        %v834 = vrot.slane %v794, %v833
        %v835 = vlaneseq
        %v836 = vshrl.u32 %v835, 7
        %v837 = vsub.s32 1, %v836
        %v838 = vrot.slane %v798, %v837
        %v839 = vlaneseq
        %v840 = vshrl.u32 %v839, 7
        %v841 = vsub.s32 1, %v840
        %v842 = vrot.slane %v802, %v841
        %v843 = vlaneseq
        %v844 = vshrl.u32 %v843, 7
        %v845 = vsub.s32 1, %v844
        %v846 = vrot.slane %v806, %v845
        %v847 = vlaneseq
        %v848 = vshrl.u32 %v847, 7
        %v849 = vsub.s32 1, %v848
        %v850 = vrot.slane %v810, %v849
        %v851 = vlaneseq
        %v852 = vshrl.u32 %v851, 7
        %v853 = vsub.s32 1, %v852
        %v854 = vrot.slane %v814, %v853
        %v855 = vlaneseq
        %v856 = vshrl.u32 %v855, 7
        %v857 = vsub.s32 1, %v856
        %v858 = vrot.slane %v818, %v857
        %v859 = vlaneseq
        %v860 = vshrl.u32 %v859, 7
        %v861 = vsub.s32 1, %v860
        %v862 = vrot.slane %v822, %v861
        %v863 = vmul.f32 %v774, %v834
        %v864 = vmul.f32 %v774, %v838
        %v865 = vmul.f32 %v774, %v842
        %v866 = vmul.f32 %v774, %v846
        %v867 = vmul.f32 %v774, %v850
        %v868 = vmul.f32 %v774, %v854
        %v869 = vmul.f32 %v774, %v858
        %v870 = vmul.f32 %v774, %v862
        %v871 = vmul.f32 %v779, %v834
        %v872 = vmul.f32 %v779, %v838
        %v873 = vmul.f32 %v779, %v842
        %v874 = vmul.f32 %v779, %v846
        %v875 = vmul.f32 %v779, %v850
        %v876 = vmul.f32 %v779, %v854
        %v877 = vmul.f32 %v779, %v858
        %v878 = vmul.f32 %v779, %v862
        %v879 = vmul.f32 %v784, %v834
        %v880 = vmul.f32 %v784, %v838
        %v881 = vmul.f32 %v784, %v842
        %v882 = vmul.f32 %v784, %v846
        %v883 = vmul.f32 %v784, %v850
        %v884 = vmul.f32 %v784, %v854
        %v885 = vmul.f32 %v784, %v858
        %v886 = vmul.f32 %v784, %v862
        %v887 = vmul.f32 %v789, %v834
        %v888 = vmul.f32 %v789, %v838
        %v889 = vmul.f32 %v789, %v842
        %v890 = vmul.f32 %v789, %v846
        %v891 = vmul.f32 %v789, %v850
        %v892 = vmul.f32 %v789, %v854
        %v893 = vmul.f32 %v789, %v858
        %v894 = vmul.f32 %v789, %v862
        %v895 = vadd.f32 %v734, %v863
        %v896 = vadd.f32 %v735, %v864
        %v897 = vadd.f32 %v736, %v865
        %v898 = vadd.f32 %v737, %v866
        %v899 = vadd.f32 %v738, %v867
        %v900 = vadd.f32 %v739, %v868
        %v901 = vadd.f32 %v740, %v869
        %v902 = vadd.f32 %v741, %v870
        %v903 = vadd.f32 %v742, %v871
        %v904 = vadd.f32 %v743, %v872
        %v905 = vadd.f32 %v744, %v873
        %v906 = vadd.f32 %v745, %v874
        %v907 = vadd.f32 %v746, %v875
        %v908 = vadd.f32 %v747, %v876
        %v909 = vadd.f32 %v748, %v877
        %v910 = vadd.f32 %v749, %v878
        %v911 = vadd.f32 %v750, %v879
        %v912 = vadd.f32 %v751, %v880
        %v913 = vadd.f32 %v752, %v881
        %v914 = vadd.f32 %v753, %v882
        %v915 = vadd.f32 %v754, %v883
        %v916 = vadd.f32 %v755, %v884
        %v917 = vadd.f32 %v756, %v885
        %v918 = vadd.f32 %v757, %v886
        %v919 = vadd.f32 %v758, %v887
        %v920 = vadd.f32 %v759, %v888
        %v921 = vadd.f32 %v760, %v889
        %v922 = vadd.f32 %v761, %v890
        %v923 = vadd.f32 %v762, %v891
        %v924 = vadd.f32 %v763, %v892
        %v925 = vadd.f32 %v764, %v893
        %v926 = vadd.f32 %v765, %v894
        %s927 = scalar_lea.vmem %s1, 64
        %v928 = vld [vmem:[%s927] sm:$0xff]
        %v929 = vld [vmem:[%s927 + $0x8] sm:$0xff]
        %v930 = vld [vmem:[%s927 + $0x10] sm:$0xff]
        %v931 = vld [vmem:[%s927 + $0x18] sm:$0xff]
        %933 = vset.pattern.permute.xlu0 0
        %934 = vperm.xlu0 %933, %v928
        %v935 = vpop.permute.xlu0 %934
        %938 = vset.pattern.permute.xlu0 0
        %939 = vperm.xlu0 %938, %v929
        %v940 = vpop.permute.xlu0 %939
        %943 = vset.pattern.permute.xlu0 0
        %944 = vperm.xlu0 %943, %v930
        %v945 = vpop.permute.xlu0 %944
        %948 = vset.pattern.permute.xlu0 0
        %949 = vperm.xlu0 %948, %v931
        %v950 = vpop.permute.xlu0 %949
        %v952 = vlaneseq
        %v953 = vshrl.u32 %v952, 7
        %v954 = vsub.s32 2, %v953
        %v955 = vrot.slane %v630, %v954
        %v956 = vlaneseq
        %v957 = vshrl.u32 %v956, 7
        %v958 = vsub.s32 6, %v957
        %v959 = vrot.slane %v630, %v958
        %v960 = vlaneseq
        %v961 = vshrl.u32 %v960, 7
        %v962 = vsub.s32 2, %v961
        %v963 = vrot.slane %v631, %v962
        %v964 = vlaneseq
        %v965 = vshrl.u32 %v964, 7
        %v966 = vsub.s32 6, %v965
        %v967 = vrot.slane %v631, %v966
        %v968 = vlaneseq
        %v969 = vshrl.u32 %v968, 7
        %v970 = vsub.s32 2, %v969
        %v971 = vrot.slane %v632, %v970
        %v972 = vlaneseq
        %v973 = vshrl.u32 %v972, 7
        %v974 = vsub.s32 6, %v973
        %v975 = vrot.slane %v632, %v974
        %v976 = vlaneseq
        %v977 = vshrl.u32 %v976, 7
        %v978 = vsub.s32 2, %v977
        %v979 = vrot.slane %v633, %v978
        %v980 = vlaneseq
        %v981 = vshrl.u32 %v980, 7
        %v982 = vsub.s32 6, %v981
        %v983 = vrot.slane %v633, %v982
        %v992 = vlaneseq
        %v993 = vshrl.u32 %v992, 7
        %v994 = vsub.s32 2, %v993
        %v995 = vrot.slane %v955, %v994
        %v996 = vlaneseq
        %v997 = vshrl.u32 %v996, 7
        %v998 = vsub.s32 2, %v997
        %v999 = vrot.slane %v959, %v998
        %v1000 = vlaneseq
        %v1001 = vshrl.u32 %v1000, 7
        %v1002 = vsub.s32 2, %v1001
        %v1003 = vrot.slane %v963, %v1002
        %v1004 = vlaneseq
        %v1005 = vshrl.u32 %v1004, 7
        %v1006 = vsub.s32 2, %v1005
        %v1007 = vrot.slane %v967, %v1006
        %v1008 = vlaneseq
        %v1009 = vshrl.u32 %v1008, 7
        %v1010 = vsub.s32 2, %v1009
        %v1011 = vrot.slane %v971, %v1010
        %v1012 = vlaneseq
        %v1013 = vshrl.u32 %v1012, 7
        %v1014 = vsub.s32 2, %v1013
        %v1015 = vrot.slane %v975, %v1014
        %v1016 = vlaneseq
        %v1017 = vshrl.u32 %v1016, 7
        %v1018 = vsub.s32 2, %v1017
        %v1019 = vrot.slane %v979, %v1018
        %v1020 = vlaneseq
        %v1021 = vshrl.u32 %v1020, 7
        %v1022 = vsub.s32 2, %v1021
        %v1023 = vrot.slane %v983, %v1022
        %v1024 = vmul.f32 %v935, %v995
        %v1025 = vmul.f32 %v935, %v999
        %v1026 = vmul.f32 %v935, %v1003
        %v1027 = vmul.f32 %v935, %v1007
        %v1028 = vmul.f32 %v935, %v1011
        %v1029 = vmul.f32 %v935, %v1015
        %v1030 = vmul.f32 %v935, %v1019
        %v1031 = vmul.f32 %v935, %v1023
        %v1032 = vmul.f32 %v940, %v995
        %v1033 = vmul.f32 %v940, %v999
        %v1034 = vmul.f32 %v940, %v1003
        %v1035 = vmul.f32 %v940, %v1007
        %v1036 = vmul.f32 %v940, %v1011
        %v1037 = vmul.f32 %v940, %v1015
        %v1038 = vmul.f32 %v940, %v1019
        %v1039 = vmul.f32 %v940, %v1023
        %v1040 = vmul.f32 %v945, %v995
        %v1041 = vmul.f32 %v945, %v999
        %v1042 = vmul.f32 %v945, %v1003
        %v1043 = vmul.f32 %v945, %v1007
        %v1044 = vmul.f32 %v945, %v1011
        %v1045 = vmul.f32 %v945, %v1015
        %v1046 = vmul.f32 %v945, %v1019
        %v1047 = vmul.f32 %v945, %v1023
        %v1048 = vmul.f32 %v950, %v995
        %v1049 = vmul.f32 %v950, %v999
        %v1050 = vmul.f32 %v950, %v1003
        %v1051 = vmul.f32 %v950, %v1007
        %v1052 = vmul.f32 %v950, %v1011
        %v1053 = vmul.f32 %v950, %v1015
        %v1054 = vmul.f32 %v950, %v1019
        %v1055 = vmul.f32 %v950, %v1023
        %v1056 = vadd.f32 %v895, %v1024
        %v1057 = vadd.f32 %v896, %v1025
        %v1058 = vadd.f32 %v897, %v1026
        %v1059 = vadd.f32 %v898, %v1027
        %v1060 = vadd.f32 %v899, %v1028
        %v1061 = vadd.f32 %v900, %v1029
        %v1062 = vadd.f32 %v901, %v1030
        %v1063 = vadd.f32 %v902, %v1031
        %v1064 = vadd.f32 %v903, %v1032
        %v1065 = vadd.f32 %v904, %v1033
        %v1066 = vadd.f32 %v905, %v1034
        %v1067 = vadd.f32 %v906, %v1035
        %v1068 = vadd.f32 %v907, %v1036
        %v1069 = vadd.f32 %v908, %v1037
        %v1070 = vadd.f32 %v909, %v1038
        %v1071 = vadd.f32 %v910, %v1039
        %v1072 = vadd.f32 %v911, %v1040
        %v1073 = vadd.f32 %v912, %v1041
        %v1074 = vadd.f32 %v913, %v1042
        %v1075 = vadd.f32 %v914, %v1043
        %v1076 = vadd.f32 %v915, %v1044
        %v1077 = vadd.f32 %v916, %v1045
        %v1078 = vadd.f32 %v917, %v1046
        %v1079 = vadd.f32 %v918, %v1047
        %v1080 = vadd.f32 %v919, %v1048
        %v1081 = vadd.f32 %v920, %v1049
        %v1082 = vadd.f32 %v921, %v1050
        %v1083 = vadd.f32 %v922, %v1051
        %v1084 = vadd.f32 %v923, %v1052
        %v1085 = vadd.f32 %v924, %v1053
        %v1086 = vadd.f32 %v925, %v1054
        %v1087 = vadd.f32 %v926, %v1055
        %s1088 = scalar_lea.vmem %s1, 96
        %v1089 = vld [vmem:[%s1088] sm:$0xff]
        %v1090 = vld [vmem:[%s1088 + $0x8] sm:$0xff]
        %v1091 = vld [vmem:[%s1088 + $0x10] sm:$0xff]
        %v1092 = vld [vmem:[%s1088 + $0x18] sm:$0xff]
        %1094 = vset.pattern.permute.xlu0 0
        %1095 = vperm.xlu0 %1094, %v1089
        %v1096 = vpop.permute.xlu0 %1095
        %1099 = vset.pattern.permute.xlu0 0
        %1100 = vperm.xlu0 %1099, %v1090
        %v1101 = vpop.permute.xlu0 %1100
        %1104 = vset.pattern.permute.xlu0 0
        %1105 = vperm.xlu0 %1104, %v1091
        %v1106 = vpop.permute.xlu0 %1105
        %1109 = vset.pattern.permute.xlu0 0
        %1110 = vperm.xlu0 %1109, %v1092
        %v1111 = vpop.permute.xlu0 %1110
        %v1113 = vlaneseq
        %v1114 = vshrl.u32 %v1113, 7
        %v1115 = vsub.s32 3, %v1114
        %v1116 = vrot.slane %v630, %v1115
        %v1117 = vlaneseq
        %v1118 = vshrl.u32 %v1117, 7
        %v1119 = vsub.s32 7, %v1118
        %v1120 = vrot.slane %v630, %v1119
        %v1121 = vlaneseq
        %v1122 = vshrl.u32 %v1121, 7
        %v1123 = vsub.s32 3, %v1122
        %v1124 = vrot.slane %v631, %v1123
        %v1125 = vlaneseq
        %v1126 = vshrl.u32 %v1125, 7
        %v1127 = vsub.s32 7, %v1126
        %v1128 = vrot.slane %v631, %v1127
        %v1129 = vlaneseq
        %v1130 = vshrl.u32 %v1129, 7
        %v1131 = vsub.s32 3, %v1130
        %v1132 = vrot.slane %v632, %v1131
        %v1133 = vlaneseq
        %v1134 = vshrl.u32 %v1133, 7
        %v1135 = vsub.s32 7, %v1134
        %v1136 = vrot.slane %v632, %v1135
        %v1137 = vlaneseq
        %v1138 = vshrl.u32 %v1137, 7
        %v1139 = vsub.s32 3, %v1138
        %v1140 = vrot.slane %v633, %v1139
        %v1141 = vlaneseq
        %v1142 = vshrl.u32 %v1141, 7
        %v1143 = vsub.s32 7, %v1142
        %v1144 = vrot.slane %v633, %v1143
        %v1153 = vlaneseq
        %v1154 = vshrl.u32 %v1153, 7
        %v1155 = vsub.s32 3, %v1154
        %v1156 = vrot.slane %v1116, %v1155
        %v1157 = vlaneseq
        %v1158 = vshrl.u32 %v1157, 7
        %v1159 = vsub.s32 3, %v1158
        %v1160 = vrot.slane %v1120, %v1159
        %v1161 = vlaneseq
        %v1162 = vshrl.u32 %v1161, 7
        %v1163 = vsub.s32 3, %v1162
        %v1164 = vrot.slane %v1124, %v1163
        %v1165 = vlaneseq
        %v1166 = vshrl.u32 %v1165, 7
        %v1167 = vsub.s32 3, %v1166
        %v1168 = vrot.slane %v1128, %v1167
        %v1169 = vlaneseq
        %v1170 = vshrl.u32 %v1169, 7
        %v1171 = vsub.s32 3, %v1170
        %v1172 = vrot.slane %v1132, %v1171
        %v1173 = vlaneseq
        %v1174 = vshrl.u32 %v1173, 7
        %v1175 = vsub.s32 3, %v1174
        %v1176 = vrot.slane %v1136, %v1175
        %v1177 = vlaneseq
        %v1178 = vshrl.u32 %v1177, 7
        %v1179 = vsub.s32 3, %v1178
        %v1180 = vrot.slane %v1140, %v1179
        %v1181 = vlaneseq
        %v1182 = vshrl.u32 %v1181, 7
        %v1183 = vsub.s32 3, %v1182
        %v1184 = vrot.slane %v1144, %v1183
        %v1185 = vmul.f32 %v1096, %v1156
        %v1186 = vmul.f32 %v1096, %v1160
        %v1187 = vmul.f32 %v1096, %v1164
        %v1188 = vmul.f32 %v1096, %v1168
        %v1189 = vmul.f32 %v1096, %v1172
        %v1190 = vmul.f32 %v1096, %v1176
        %v1191 = vmul.f32 %v1096, %v1180
        %v1192 = vmul.f32 %v1096, %v1184
        %v1193 = vmul.f32 %v1101, %v1156
        %v1194 = vmul.f32 %v1101, %v1160
        %v1195 = vmul.f32 %v1101, %v1164
        %v1196 = vmul.f32 %v1101, %v1168
        %v1197 = vmul.f32 %v1101, %v1172
        %v1198 = vmul.f32 %v1101, %v1176
        %v1199 = vmul.f32 %v1101, %v1180
        %v1200 = vmul.f32 %v1101, %v1184
        %v1201 = vmul.f32 %v1106, %v1156
        %v1202 = vmul.f32 %v1106, %v1160
        %v1203 = vmul.f32 %v1106, %v1164
        %v1204 = vmul.f32 %v1106, %v1168
        %v1205 = vmul.f32 %v1106, %v1172
        %v1206 = vmul.f32 %v1106, %v1176
        %v1207 = vmul.f32 %v1106, %v1180
        %v1208 = vmul.f32 %v1106, %v1184
        %v1209 = vmul.f32 %v1111, %v1156
        %v1210 = vmul.f32 %v1111, %v1160
        %v1211 = vmul.f32 %v1111, %v1164
        %v1212 = vmul.f32 %v1111, %v1168
        %v1213 = vmul.f32 %v1111, %v1172
        %v1214 = vmul.f32 %v1111, %v1176
        %v1215 = vmul.f32 %v1111, %v1180
        %v1216 = vmul.f32 %v1111, %v1184
        %v1217 = vadd.f32 %v1056, %v1185
        %v1218 = vadd.f32 %v1057, %v1186
        %v1219 = vadd.f32 %v1058, %v1187
        %v1220 = vadd.f32 %v1059, %v1188
        %v1221 = vadd.f32 %v1060, %v1189
        %v1222 = vadd.f32 %v1061, %v1190
        %v1223 = vadd.f32 %v1062, %v1191
        %v1224 = vadd.f32 %v1063, %v1192
        %v1225 = vadd.f32 %v1064, %v1193
        %v1226 = vadd.f32 %v1065, %v1194
        %v1227 = vadd.f32 %v1066, %v1195
        %v1228 = vadd.f32 %v1067, %v1196
        %v1229 = vadd.f32 %v1068, %v1197
        %v1230 = vadd.f32 %v1069, %v1198
        %v1231 = vadd.f32 %v1070, %v1199
        %v1232 = vadd.f32 %v1071, %v1200
        %v1233 = vadd.f32 %v1072, %v1201
        %v1234 = vadd.f32 %v1073, %v1202
        %v1235 = vadd.f32 %v1074, %v1203
        %v1236 = vadd.f32 %v1075, %v1204
        %v1237 = vadd.f32 %v1076, %v1205
        %v1238 = vadd.f32 %v1077, %v1206
        %v1239 = vadd.f32 %v1078, %v1207
        %v1240 = vadd.f32 %v1079, %v1208
        %v1241 = vadd.f32 %v1080, %v1209
        %v1242 = vadd.f32 %v1081, %v1210
        %v1243 = vadd.f32 %v1082, %v1211
        %v1244 = vadd.f32 %v1083, %v1212
        %v1245 = vadd.f32 %v1084, %v1213
        %v1246 = vadd.f32 %v1085, %v1214
        %v1247 = vadd.f32 %v1086, %v1215
        %v1248 = vadd.f32 %v1087, %v1216
        %v1249 = vld [vmem:[%s2] sm:$0xff]
        %v1250 = vld [vmem:[%s2 + $0x8] sm:$0xff]
        %v1251 = vld [vmem:[%s2 + $0x10] sm:$0xff]
        %v1252 = vld [vmem:[%s2 + $0x18] sm:$0xff]
        %1254 = vset.pattern.permute.xlu0 0
        %1255 = vperm.xlu0 %1254, %v1249
        %v1256 = vpop.permute.xlu0 %1255
        %1259 = vset.pattern.permute.xlu0 0
        %1260 = vperm.xlu0 %1259, %v1250
        %v1261 = vpop.permute.xlu0 %1260
        %1264 = vset.pattern.permute.xlu0 0
        %1265 = vperm.xlu0 %1264, %v1251
        %v1266 = vpop.permute.xlu0 %1265
        %1269 = vset.pattern.permute.xlu0 0
        %1270 = vperm.xlu0 %1269, %v1252
        %v1271 = vpop.permute.xlu0 %1270
        %v1273 = vadd.f32 %v1217, %v1256
        %v1274 = vadd.f32 %v1218, %v1256
        %v1275 = vadd.f32 %v1219, %v1256
        %v1276 = vadd.f32 %v1220, %v1256
        %v1277 = vadd.f32 %v1221, %v1256
        %v1278 = vadd.f32 %v1222, %v1256
        %v1279 = vadd.f32 %v1223, %v1256
        %v1280 = vadd.f32 %v1224, %v1256
        %v1281 = vadd.f32 %v1225, %v1261
        %v1282 = vadd.f32 %v1226, %v1261
        %v1283 = vadd.f32 %v1227, %v1261
        %v1284 = vadd.f32 %v1228, %v1261
        %v1285 = vadd.f32 %v1229, %v1261
        %v1286 = vadd.f32 %v1230, %v1261
        %v1287 = vadd.f32 %v1231, %v1261
        %v1288 = vadd.f32 %v1232, %v1261
        %v1289 = vadd.f32 %v1233, %v1266
        %v1290 = vadd.f32 %v1234, %v1266
        %v1291 = vadd.f32 %v1235, %v1266
        %v1292 = vadd.f32 %v1236, %v1266
        %v1293 = vadd.f32 %v1237, %v1266
        %v1294 = vadd.f32 %v1238, %v1266
        %v1295 = vadd.f32 %v1239, %v1266
        %v1296 = vadd.f32 %v1240, %v1266
        %v1297 = vadd.f32 %v1241, %v1271
        %v1298 = vadd.f32 %v1242, %v1271
        %v1299 = vadd.f32 %v1243, %v1271
        %v1300 = vadd.f32 %v1244, %v1271
        %v1301 = vadd.f32 %v1245, %v1271
        %v1302 = vadd.f32 %v1246, %v1271
        %v1303 = vadd.f32 %v1247, %v1271
        %v1304 = vadd.f32 %v1248, %v1271
        %v1305 = vmax.f32 %v1273, 0.0
        %v1306 = vmax.f32 %v1274, 0.0
        %v1307 = vmax.f32 %v1275, 0.0
        %v1308 = vmax.f32 %v1276, 0.0
        %v1309 = vmax.f32 %v1277, 0.0
        %v1310 = vmax.f32 %v1278, 0.0
        %v1311 = vmax.f32 %v1279, 0.0
        %v1312 = vmax.f32 %v1280, 0.0
        %v1313 = vmax.f32 %v1281, 0.0
        %v1314 = vmax.f32 %v1282, 0.0
        %v1315 = vmax.f32 %v1283, 0.0
        %v1316 = vmax.f32 %v1284, 0.0
        %v1317 = vmax.f32 %v1285, 0.0
        %v1318 = vmax.f32 %v1286, 0.0
        %v1319 = vmax.f32 %v1287, 0.0
        %v1320 = vmax.f32 %v1288, 0.0
        %v1321 = vmax.f32 %v1289, 0.0
        %v1322 = vmax.f32 %v1290, 0.0
        %v1323 = vmax.f32 %v1291, 0.0
        %v1324 = vmax.f32 %v1292, 0.0
        %v1325 = vmax.f32 %v1293, 0.0
        %v1326 = vmax.f32 %v1294, 0.0
        %v1327 = vmax.f32 %v1295, 0.0
        %v1328 = vmax.f32 %v1296, 0.0
        %v1329 = vmax.f32 %v1297, 0.0
        %v1330 = vmax.f32 %v1298, 0.0
        %v1331 = vmax.f32 %v1299, 0.0
        %v1332 = vmax.f32 %v1300, 0.0
        %v1333 = vmax.f32 %v1301, 0.0
        %v1334 = vmax.f32 %v1302, 0.0
        %v1335 = vmax.f32 %v1303, 0.0
        %v1336 = vmax.f32 %v1304, 0.0
        %v1337 = vld [vmem:[#allocation2] sm:$0x1]
        %1338 = vmatprep.subr.mxu0 %v1306
        %1339 = vmatpush1.xpose.msra.mxu0 %v1305
        %1340 = vmatprep.subr.mxu0 %v1314
        %1341 = vmatpush1.xpose.msra.mxu0 %v1313
        %1342 = vmatprep.subr.mxu0 %v1322
        %1343 = vmatpush1.xpose.msra.mxu0 %v1321
        %1344 = vmatprep.subr.mxu0 %v1330
        %1345 = vmatpush1.xpose.msra.mxu0 %v1329
        %1346 = vmatprep.subr.mxu0 0.0
        %1347 = vmatpush1.xpose.msra.mxu0 0.0
        %1348 = vmatprep.subr.mxu0 0.0
        %1349 = vmatpush1.xpose.msra.mxu0 0.0
        %1350 = vmatprep.subr.mxu0 0.0
        %1351 = vmatpush1.xpose.msra.mxu0 0.0
        %1352 = vmatprep.subr.mxu0 0.0
        %1353 = vmatpush1.xpose.msra.mxu0 0.0
        %1354 = vmatprep.subr.mxu0 0.0
        %1355 = vmatpush1.xpose.msra.mxu0 0.0
        %1356 = vmatprep.subr.mxu0 0.0
        %1357 = vmatpush1.xpose.msra.mxu0 0.0
        %1358 = vmatprep.subr.mxu0 0.0
        %1359 = vmatpush1.xpose.msra.mxu0 0.0
        %1360 = vmatprep.subr.mxu0 0.0
        %1361 = vmatpush1.xpose.msra.mxu0 0.0
        %1362 = vmatprep.subr.mxu0 0.0
        %1363 = vmatpush1.xpose.msra.mxu0 0.0
        %1364 = vmatprep.subr.mxu0 0.0
        %1365 = vmatpush1.xpose.msra.mxu0 0.0
        %1366 = vmatprep.subr.mxu0 0.0
        %1367 = vmatpush1.xpose.msra.mxu0 0.0
        %1368 = vmatprep.subr.mxu0 0.0
        %1369 = vmatpush1.xpose.msra.mxu0 0.0
        %1370 = vmatprep.subr.mxu0 0.0
        %1371 = vmatpush1.xpose.msra.mxu0 0.0
        %1372 = vmatprep.subr.mxu0 0.0
        %1373 = vmatpush1.xpose.msra.mxu0 0.0
        %1374 = vmatprep.subr.mxu0 0.0
        %1375 = vmatpush1.xpose.msra.mxu0 0.0
        %1376 = vmatprep.subr.mxu0 0.0
        %1377 = vmatpush1.xpose.msra.mxu0 0.0
        %1378 = vmatprep.subr.mxu0 0.0
        %1379 = vmatpush1.xpose.msra.mxu0 0.0
        %1380 = vmatprep.subr.mxu0 0.0
        %1381 = vmatpush1.xpose.msra.mxu0 0.0
        %1382 = vmatprep.subr.mxu0 0.0
        %1383 = vmatpush1.xpose.msra.mxu0 0.0
        %1384 = vmatprep.subr.mxu0 0.0
        %1385 = vmatpush1.xpose.msra.mxu0 0.0
        %1386 = vmatprep.subr.mxu0 0.0
        %1387 = vmatpush1.xpose.msra.mxu0 0.0
        %1388 = vmatprep.subr.mxu0 0.0
        %1389 = vmatpush1.xpose.msra.mxu0 0.0
        %1390 = vmatprep.subr.mxu0 0.0
        %1391 = vmatpush1.xpose.msra.mxu0 0.0
        %1392 = vmatprep.subr.mxu0 0.0
        %1393 = vmatpush1.xpose.msra.mxu0 0.0
        %1394 = vmatprep.subr.mxu0 0.0
        %1395 = vmatpush1.xpose.msra.mxu0 0.0
        %1396 = vmatprep.subr.mxu0 0.0
        %1397 = vmatpush1.xpose.msra.mxu0 0.0
        %1398 = vmatprep.subr.mxu0 0.0
        %1399 = vmatpush1.xpose.msra.mxu0 0.0
        %1400 = vmatprep.subr.mxu0 0.0
        %1401 = vmatpush1.xpose.msra.mxu0 0.0
        %1402 = vmatprep.mubr.f32.mxu0 1.0
        %1403 = vmatmul.mubr.f32.gmra.mrb[0].mxu0 1.0
        %v1404 = vpop.f32.mrb[0].mxu0
        %v1405 = vadd.f32 0.0, %v1404
        %v1406 = vpop.f32.mrb[0].mxu0
        %1407 = vdwg.mxu0
        %1408 = vmatprep.subr.mxu0 %v1308
        %1409 = vmatpush1.xpose.msra.mxu0 %v1307
        %1410 = vmatprep.subr.mxu0 %v1316
        %1411 = vmatpush1.xpose.msra.mxu0 %v1315
        %1412 = vmatprep.subr.mxu0 %v1324
        %1413 = vmatpush1.xpose.msra.mxu0 %v1323
        %1414 = vmatprep.subr.mxu0 %v1332
        %1415 = vmatpush1.xpose.msra.mxu0 %v1331
        %1416 = vmatprep.subr.mxu0 0.0
        %1417 = vmatpush1.xpose.msra.mxu0 0.0
        %1418 = vmatprep.subr.mxu0 0.0
        %1419 = vmatpush1.xpose.msra.mxu0 0.0
        %1420 = vmatprep.subr.mxu0 0.0
        %1421 = vmatpush1.xpose.msra.mxu0 0.0
        %1422 = vmatprep.subr.mxu0 0.0
        %1423 = vmatpush1.xpose.msra.mxu0 0.0
        %1424 = vmatprep.subr.mxu0 0.0
        %1425 = vmatpush1.xpose.msra.mxu0 0.0
        %1426 = vmatprep.subr.mxu0 0.0
        %1427 = vmatpush1.xpose.msra.mxu0 0.0
        %1428 = vmatprep.subr.mxu0 0.0
        %1429 = vmatpush1.xpose.msra.mxu0 0.0
        %1430 = vmatprep.subr.mxu0 0.0
        %1431 = vmatpush1.xpose.msra.mxu0 0.0
        %1432 = vmatprep.subr.mxu0 0.0
        %1433 = vmatpush1.xpose.msra.mxu0 0.0
        %1434 = vmatprep.subr.mxu0 0.0
        %1435 = vmatpush1.xpose.msra.mxu0 0.0
        %1436 = vmatprep.subr.mxu0 0.0
        %1437 = vmatpush1.xpose.msra.mxu0 0.0
        %1438 = vmatprep.subr.mxu0 0.0
        %1439 = vmatpush1.xpose.msra.mxu0 0.0
        %1440 = vmatprep.subr.mxu0 0.0
        %1441 = vmatpush1.xpose.msra.mxu0 0.0
        %1442 = vmatprep.subr.mxu0 0.0
        %1443 = vmatpush1.xpose.msra.mxu0 0.0
        %1444 = vmatprep.subr.mxu0 0.0
        %1445 = vmatpush1.xpose.msra.mxu0 0.0
        %1446 = vmatprep.subr.mxu0 0.0
        %1447 = vmatpush1.xpose.msra.mxu0 0.0
        %1448 = vmatprep.subr.mxu0 0.0
        %1449 = vmatpush1.xpose.msra.mxu0 0.0
        %1450 = vmatprep.subr.mxu0 0.0
        %1451 = vmatpush1.xpose.msra.mxu0 0.0
        %1452 = vmatprep.subr.mxu0 0.0
        %1453 = vmatpush1.xpose.msra.mxu0 0.0
        %1454 = vmatprep.subr.mxu0 0.0
        %1455 = vmatpush1.xpose.msra.mxu0 0.0
        %1456 = vmatprep.subr.mxu0 0.0
        %1457 = vmatpush1.xpose.msra.mxu0 0.0
        %1458 = vmatprep.subr.mxu0 0.0
        %1459 = vmatpush1.xpose.msra.mxu0 0.0
        %1460 = vmatprep.subr.mxu0 0.0
        %1461 = vmatpush1.xpose.msra.mxu0 0.0
        %1462 = vmatprep.subr.mxu0 0.0
        %1463 = vmatpush1.xpose.msra.mxu0 0.0
        %1464 = vmatprep.subr.mxu0 0.0
        %1465 = vmatpush1.xpose.msra.mxu0 0.0
        %1466 = vmatprep.subr.mxu0 0.0
        %1467 = vmatpush1.xpose.msra.mxu0 0.0
        %1468 = vmatprep.subr.mxu0 0.0
        %1469 = vmatpush1.xpose.msra.mxu0 0.0
        %1470 = vmatprep.subr.mxu0 0.0
        %1471 = vmatpush1.xpose.msra.mxu0 0.0
        %1472 = vmatprep.mubr.f32.mxu0 1.0
        %1473 = vmatmul.mubr.f32.gmra.mrb[0].mxu0 1.0
        %v1474 = vpop.f32.mrb[0].mxu0
        %v1475 = vadd.f32 %v1405, %v1474
        %v1476 = vpop.f32.mrb[0].mxu0
        %1477 = vdwg.mxu0
        %1478 = vmatprep.subr.mxu0 %v1310
        %1479 = vmatpush1.xpose.msra.mxu0 %v1309
        %1480 = vmatprep.subr.mxu0 %v1318
        %1481 = vmatpush1.xpose.msra.mxu0 %v1317
        %1482 = vmatprep.subr.mxu0 %v1326
        %1483 = vmatpush1.xpose.msra.mxu0 %v1325
        %1484 = vmatprep.subr.mxu0 %v1334
        %1485 = vmatpush1.xpose.msra.mxu0 %v1333
        %1486 = vmatprep.subr.mxu0 0.0
        %1487 = vmatpush1.xpose.msra.mxu0 0.0
        %1488 = vmatprep.subr.mxu0 0.0
        %1489 = vmatpush1.xpose.msra.mxu0 0.0
        %1490 = vmatprep.subr.mxu0 0.0
        %1491 = vmatpush1.xpose.msra.mxu0 0.0
        %1492 = vmatprep.subr.mxu0 0.0
        %1493 = vmatpush1.xpose.msra.mxu0 0.0
        %1494 = vmatprep.subr.mxu0 0.0
        %1495 = vmatpush1.xpose.msra.mxu0 0.0
        %1496 = vmatprep.subr.mxu0 0.0
        %1497 = vmatpush1.xpose.msra.mxu0 0.0
        %1498 = vmatprep.subr.mxu0 0.0
        %1499 = vmatpush1.xpose.msra.mxu0 0.0
        %1500 = vmatprep.subr.mxu0 0.0
        %1501 = vmatpush1.xpose.msra.mxu0 0.0
        %1502 = vmatprep.subr.mxu0 0.0
        %1503 = vmatpush1.xpose.msra.mxu0 0.0
        %1504 = vmatprep.subr.mxu0 0.0
        %1505 = vmatpush1.xpose.msra.mxu0 0.0
        %1506 = vmatprep.subr.mxu0 0.0
        %1507 = vmatpush1.xpose.msra.mxu0 0.0
        %1508 = vmatprep.subr.mxu0 0.0
        %1509 = vmatpush1.xpose.msra.mxu0 0.0
        %1510 = vmatprep.subr.mxu0 0.0
        %1511 = vmatpush1.xpose.msra.mxu0 0.0
        %1512 = vmatprep.subr.mxu0 0.0
        %1513 = vmatpush1.xpose.msra.mxu0 0.0
        %1514 = vmatprep.subr.mxu0 0.0
        %1515 = vmatpush1.xpose.msra.mxu0 0.0
        %1516 = vmatprep.subr.mxu0 0.0
        %1517 = vmatpush1.xpose.msra.mxu0 0.0
        %1518 = vmatprep.subr.mxu0 0.0
        %1519 = vmatpush1.xpose.msra.mxu0 0.0
        %1520 = vmatprep.subr.mxu0 0.0
        %1521 = vmatpush1.xpose.msra.mxu0 0.0
        %1522 = vmatprep.subr.mxu0 0.0
        %1523 = vmatpush1.xpose.msra.mxu0 0.0
        %1524 = vmatprep.subr.mxu0 0.0
        %1525 = vmatpush1.xpose.msra.mxu0 0.0
        %1526 = vmatprep.subr.mxu0 0.0
        %1527 = vmatpush1.xpose.msra.mxu0 0.0
        %1528 = vmatprep.subr.mxu0 0.0
        %1529 = vmatpush1.xpose.msra.mxu0 0.0
        %1530 = vmatprep.subr.mxu0 0.0
        %1531 = vmatpush1.xpose.msra.mxu0 0.0
        %1532 = vmatprep.subr.mxu0 0.0
        %1533 = vmatpush1.xpose.msra.mxu0 0.0
        %1534 = vmatprep.subr.mxu0 0.0
        %1535 = vmatpush1.xpose.msra.mxu0 0.0
        %1536 = vmatprep.subr.mxu0 0.0
        %1537 = vmatpush1.xpose.msra.mxu0 0.0
        %1538 = vmatprep.subr.mxu0 0.0
        %1539 = vmatpush1.xpose.msra.mxu0 0.0
        %1540 = vmatprep.subr.mxu0 0.0
        %1541 = vmatpush1.xpose.msra.mxu0 0.0
        %1542 = vmatprep.mubr.f32.mxu0 1.0
        %1543 = vmatmul.mubr.f32.gmra.mrb[0].mxu0 1.0
        %v1544 = vpop.f32.mrb[0].mxu0
        %v1545 = vadd.f32 %v1475, %v1544
        %v1546 = vpop.f32.mrb[0].mxu0
        %1547 = vdwg.mxu0
        %1548 = vmatprep.subr.mxu0 %v1312
        %1549 = vmatpush1.xpose.msra.mxu0 %v1311
        %1550 = vmatprep.subr.mxu0 %v1320
        %1551 = vmatpush1.xpose.msra.mxu0 %v1319
        %1552 = vmatprep.subr.mxu0 %v1328
        %1553 = vmatpush1.xpose.msra.mxu0 %v1327
        %1554 = vmatprep.subr.mxu0 %v1336
        %1555 = vmatpush1.xpose.msra.mxu0 %v1335
        %1556 = vmatprep.subr.mxu0 0.0
        %1557 = vmatpush1.xpose.msra.mxu0 0.0
        %1558 = vmatprep.subr.mxu0 0.0
        %1559 = vmatpush1.xpose.msra.mxu0 0.0
        %1560 = vmatprep.subr.mxu0 0.0
        %1561 = vmatpush1.xpose.msra.mxu0 0.0
        %1562 = vmatprep.subr.mxu0 0.0
        %1563 = vmatpush1.xpose.msra.mxu0 0.0
        %1564 = vmatprep.subr.mxu0 0.0
        %1565 = vmatpush1.xpose.msra.mxu0 0.0
        %1566 = vmatprep.subr.mxu0 0.0
        %1567 = vmatpush1.xpose.msra.mxu0 0.0
        %1568 = vmatprep.subr.mxu0 0.0
        %1569 = vmatpush1.xpose.msra.mxu0 0.0
        %1570 = vmatprep.subr.mxu0 0.0
        %1571 = vmatpush1.xpose.msra.mxu0 0.0
        %1572 = vmatprep.subr.mxu0 0.0
        %1573 = vmatpush1.xpose.msra.mxu0 0.0
        %1574 = vmatprep.subr.mxu0 0.0
        %1575 = vmatpush1.xpose.msra.mxu0 0.0
        %1576 = vmatprep.subr.mxu0 0.0
        %1577 = vmatpush1.xpose.msra.mxu0 0.0
        %1578 = vmatprep.subr.mxu0 0.0
        %1579 = vmatpush1.xpose.msra.mxu0 0.0
        %1580 = vmatprep.subr.mxu0 0.0
        %1581 = vmatpush1.xpose.msra.mxu0 0.0
        %1582 = vmatprep.subr.mxu0 0.0
        %1583 = vmatpush1.xpose.msra.mxu0 0.0
        %1584 = vmatprep.subr.mxu0 0.0
        %1585 = vmatpush1.xpose.msra.mxu0 0.0
        %1586 = vmatprep.subr.mxu0 0.0
        %1587 = vmatpush1.xpose.msra.mxu0 0.0
        %1588 = vmatprep.subr.mxu0 0.0
        %1589 = vmatpush1.xpose.msra.mxu0 0.0
        %1590 = vmatprep.subr.mxu0 0.0
        %1591 = vmatpush1.xpose.msra.mxu0 0.0
        %1592 = vmatprep.subr.mxu0 0.0
        %1593 = vmatpush1.xpose.msra.mxu0 0.0
        %1594 = vmatprep.subr.mxu0 0.0
        %1595 = vmatpush1.xpose.msra.mxu0 0.0
        %1596 = vmatprep.subr.mxu0 0.0
        %1597 = vmatpush1.xpose.msra.mxu0 0.0
        %1598 = vmatprep.subr.mxu0 0.0
        %1599 = vmatpush1.xpose.msra.mxu0 0.0
        %1600 = vmatprep.subr.mxu0 0.0
        %1601 = vmatpush1.xpose.msra.mxu0 0.0
        %1602 = vmatprep.subr.mxu0 0.0
        %1603 = vmatpush1.xpose.msra.mxu0 0.0
        %1604 = vmatprep.subr.mxu0 0.0
        %1605 = vmatpush1.xpose.msra.mxu0 0.0
        %1606 = vmatprep.subr.mxu0 0.0
        %1607 = vmatpush1.xpose.msra.mxu0 0.0
        %1608 = vmatprep.subr.mxu0 0.0
        %1609 = vmatpush1.xpose.msra.mxu0 0.0
        %1610 = vmatprep.subr.mxu0 0.0
        %1611 = vmatpush1.xpose.msra.mxu0 0.0
        %1612 = vmatprep.mubr.f32.mxu0 1.0
        %1613 = vmatmul.mubr.f32.gmra.mrb[0].mxu0 1.0
        %v1614 = vpop.f32.mrb[0].mxu0
        %v1615 = vadd.f32 %v1545, %v1614
        %v1616 = vpop.f32.mrb[0].mxu0
        %1617 = vdwg.mxu0
        %v1618 = vadd.f32 %v1337, %v1615
        %vm1619 = vcmask 253952
        %1620 = vst.msk [vmem:[#allocation2] sm:$0x1] %vm1619, %v1618
        %p1621 = scmp.eq.s32.totalorder %s46, 1
        // Predicated region
        $region77: #{tpu_custom_call.1} parent=59 // pred_check
          %p1622 = pneg %p1621
        $region78: #{tpu_custom_call.1} parent=59 // pred_check_branch
          %1624 = sbr.rel (%p1622) target = $region80
        $region79: #{tpu_custom_call.1} parent=59 // pred_region
          %v1625 = vld [vmem:[#allocation2] sm:$0x1]
          %v1626 = vmul.f32 %v1625, 0.00048828125
          %v1627 = vld [vmem:[#allocation3] sm:$0xff]
          %v1628 = vld [vmem:[#allocation3 + $0x8] sm:$0xff]
          %v1629 = vld [vmem:[#allocation3 + $0x10] sm:$0xff]
          %v1630 = vld [vmem:[#allocation3 + $0x18] sm:$0xff]
          %v1631 = vld [vmem:[#allocation3 + $0x20] sm:$0xff]
          %v1632 = vld [vmem:[#allocation3 + $0x28] sm:$0xff]
          %v1633 = vld [vmem:[#allocation3 + $0x30] sm:$0xff]
          %v1634 = vld [vmem:[#allocation3 + $0x38] sm:$0xff]
          %v1635 = vld [vmem:[%s4] sm:$0x3]
          %v1637 = vlaneseq
          %v1638 = vshrl.u32 %v1637, 7
          %v1639 = vsub.s32 0, %v1638
          %v1640 = vrot.slane %v1635, %v1639
          %v1641 = vlaneseq
          %v1642 = vshrl.u32 %v1641, 7
          %v1643 = vsub.s32 1, %v1642
          %v1644 = vrot.slane %v1635, %v1643
          %vm1647 = vcmask 261120
          %v1649 = vsel %vm1647, %v1626, 0
          %1651 = vmatprep.subr.mxu0 %v1628
          %1652 = vmatpush1.msra.mxu0 %v1627
          %1653 = vmatprep.subr.mxu0 %v1630
          %1654 = vmatpush1.msra.mxu0 %v1629
          %1655 = vmatprep.subr.mxu0 %v1632
          %1656 = vmatpush1.msra.mxu0 %v1631
          %1657 = vmatprep.subr.mxu0 %v1634
          %1658 = vmatpush1.msra.mxu0 %v1633
          %1659 = vmatprep.subr.mxu0 0.0
          %1660 = vmatpush1.msra.mxu0 0.0
          %1661 = vmatprep.subr.mxu0 0.0
          %1662 = vmatpush1.msra.mxu0 0.0
          %1663 = vmatprep.subr.mxu0 0.0
          %1664 = vmatpush1.msra.mxu0 0.0
          %1665 = vmatprep.subr.mxu0 0.0
          %1666 = vmatpush1.msra.mxu0 0.0
          %1667 = vmatprep.subr.mxu0 0.0
          %1668 = vmatpush1.msra.mxu0 0.0
          %1669 = vmatprep.subr.mxu0 0.0
          %1670 = vmatpush1.msra.mxu0 0.0
          %1671 = vmatprep.subr.mxu0 0.0
          %1672 = vmatpush1.msra.mxu0 0.0
          %1673 = vmatprep.subr.mxu0 0.0
          %1674 = vmatpush1.msra.mxu0 0.0
          %1675 = vmatprep.subr.mxu0 0.0
          %1676 = vmatpush1.msra.mxu0 0.0
          %1677 = vmatprep.subr.mxu0 0.0
          %1678 = vmatpush1.msra.mxu0 0.0
          %1679 = vmatprep.subr.mxu0 0.0
          %1680 = vmatpush1.msra.mxu0 0.0
          %1681 = vmatprep.subr.mxu0 0.0
          %1682 = vmatpush1.msra.mxu0 0.0
          %1683 = vmatprep.subr.mxu0 0.0
          %1684 = vmatpush1.msra.mxu0 0.0
          %1685 = vmatprep.subr.mxu0 0.0
          %1686 = vmatpush1.msra.mxu0 0.0
          %1687 = vmatprep.subr.mxu0 0.0
          %1688 = vmatpush1.msra.mxu0 0.0
          %1689 = vmatprep.subr.mxu0 0.0
          %1690 = vmatpush1.msra.mxu0 0.0
          %1691 = vmatprep.subr.mxu0 0.0
          %1692 = vmatpush1.msra.mxu0 0.0
          %1693 = vmatprep.subr.mxu0 0.0
          %1694 = vmatpush1.msra.mxu0 0.0
          %1695 = vmatprep.subr.mxu0 0.0
          %1696 = vmatpush1.msra.mxu0 0.0
          %1697 = vmatprep.subr.mxu0 0.0
          %1698 = vmatpush1.msra.mxu0 0.0
          %1699 = vmatprep.subr.mxu0 0.0
          %1700 = vmatpush1.msra.mxu0 0.0
          %1701 = vmatprep.subr.mxu0 0.0
          %1702 = vmatpush1.msra.mxu0 0.0
          %1703 = vmatprep.subr.mxu0 0.0
          %1704 = vmatpush1.msra.mxu0 0.0
          %1705 = vmatprep.subr.mxu0 0.0
          %1706 = vmatpush1.msra.mxu0 0.0
          %1707 = vmatprep.subr.mxu0 0.0
          %1708 = vmatpush1.msra.mxu0 0.0
          %1709 = vmatprep.subr.mxu0 0.0
          %1710 = vmatpush1.msra.mxu0 0.0
          %1711 = vmatprep.subr.mxu0 0.0
          %1712 = vmatpush1.msra.mxu0 0.0
          %1713 = vmatprep.subr.mxu0 0.0
          %1714 = vmatpush1.msra.mxu0 0.0
          %1715 = vmatprep.mubr.f32.mxu0 0.0
          %1716 = vmatmul.mubr.f32.gmra.mrb[0].mxu0 %v1649
          %v1717 = vpop.f32.mrb[0].mxu0
          %v1718 = vadd.f32 %v1640, %v1717
          %v1719 = vpop.f32.mrb[0].mxu0
          %v1720 = vadd.f32 %v1644, %v1719
          %1721 = vdwg.mxu0
          %v1722 = vmul.f32 %v1720, 1.442695
          %v1723 = vpow.pop %v1722
          %v1724 = vld [vmem:[%s623] sm:$0xf]
          %v1725 = vrsqrt.pop %v1723
          %v1726 = vmul.f32 %v1723, %v1725
          %vm1727 = vcmp.eq.f32.partialorder %v1723, inf
          %v1728 = vsel %vm1727, %v1723, %v1726
          %vm1729 = vcmp.eq.f32.partialorder %v1723, 0.0
          %v1730 = vand.u32 %v1723, 2147483648
          %v1731 = vsel %vm1729, %v1730, %v1728
          %v1732 = vlaneseq
          %v1733 = vshrl.u32 %v1732, 7
          %v1734 = vsub.s32 0, %v1733
          %v1735 = vrot.slane %v1731, %v1734
          %v1736 = vmul.f32 %v1735, %v1724
          %v1737 = vlaneseq
          %v1738 = vshrl.u32 %v1737, 7
          %v1739 = vsub.s32 0, %v1738
          %v1740 = vrot.slane %v1718, %v1739
          %v1741 = vadd.f32 %v1740, %v1736
          %v1742 = vld [vmem:[#allocation6] sm:$0xff]
          %v1743 = vld [vmem:[#allocation6 + $0x8] sm:$0xff]
          %v1744 = vld [vmem:[#allocation6 + $0x10] sm:$0xff]
          %v1745 = vld [vmem:[#allocation6 + $0x18] sm:$0xff]
          %v1746 = vld [vmem:[#allocation6 + $0x20] sm:$0xff]
          %v1747 = vld [vmem:[#allocation6 + $0x28] sm:$0xff]
          %v1748 = vld [vmem:[#allocation6 + $0x30] sm:$0xff]
          %v1749 = vld [vmem:[#allocation6 + $0x38] sm:$0xff]
          %v1750 = vld [vmem:[#allocation6 + $0x40] sm:$0xff]
          %v1751 = vld [vmem:[#allocation6 + $0x48] sm:$0xff]
          %v1752 = vld [vmem:[#allocation6 + $0x50] sm:$0xff]
          %v1753 = vld [vmem:[#allocation6 + $0x58] sm:$0xff]
          %v1754 = vld [vmem:[#allocation6 + $0x60] sm:$0xff]
          %v1755 = vld [vmem:[#allocation6 + $0x68] sm:$0xff]
          %v1756 = vld [vmem:[#allocation6 + $0x70] sm:$0xff]
          %v1757 = vld [vmem:[#allocation6 + $0x78] sm:$0xff]
          %v1758 = vld [vmem:[%s7] sm:$0x1]
          %v1760 = vlaneseq
          %v1761 = vshrl.u32 %v1760, 7
          %v1762 = vsub.s32 0, %v1761
          %v1763 = vrot.slane %v1758, %v1762
          %1765 = vmatprep.subr.mxu0 0.0
          %1766 = vmatpush1.msra.mxu0 %v1742
          %1767 = vmatprep.subr.mxu0 0.0
          %1768 = vmatpush1.msra.mxu0 %v1743
          %1769 = vmatprep.subr.mxu0 0.0
          %1770 = vmatpush1.msra.mxu0 %v1744
          %1771 = vmatprep.subr.mxu0 0.0
          %1772 = vmatpush1.msra.mxu0 %v1745
          %1773 = vmatprep.subr.mxu0 0.0
          %1774 = vmatpush1.msra.mxu0 %v1746
          %1775 = vmatprep.subr.mxu0 0.0
          %1776 = vmatpush1.msra.mxu0 %v1747
          %1777 = vmatprep.subr.mxu0 0.0
          %1778 = vmatpush1.msra.mxu0 %v1748
          %1779 = vmatprep.subr.mxu0 0.0
          %1780 = vmatpush1.msra.mxu0 %v1749
          %1781 = vmatprep.subr.mxu0 0.0
          %1782 = vmatpush1.msra.mxu0 %v1750
          %1783 = vmatprep.subr.mxu0 0.0
          %1784 = vmatpush1.msra.mxu0 %v1751
          %1785 = vmatprep.subr.mxu0 0.0
          %1786 = vmatpush1.msra.mxu0 %v1752
          %1787 = vmatprep.subr.mxu0 0.0
          %1788 = vmatpush1.msra.mxu0 %v1753
          %1789 = vmatprep.subr.mxu0 0.0
          %1790 = vmatpush1.msra.mxu0 %v1754
          %1791 = vmatprep.subr.mxu0 0.0
          %1792 = vmatpush1.msra.mxu0 %v1755
          %1793 = vmatprep.subr.mxu0 0.0
          %1794 = vmatpush1.msra.mxu0 %v1756
          %1795 = vmatprep.subr.mxu0 0.0
          %1796 = vmatpush1.msra.mxu0 %v1757
          %1797 = vmatprep.subr.mxu0 0.0
          %1798 = vmatpush1.msra.mxu0 0.0
          %1799 = vmatprep.subr.mxu0 0.0
          %1800 = vmatpush1.msra.mxu0 0.0
          %1801 = vmatprep.subr.mxu0 0.0
          %1802 = vmatpush1.msra.mxu0 0.0
          %1803 = vmatprep.subr.mxu0 0.0
          %1804 = vmatpush1.msra.mxu0 0.0
          %1805 = vmatprep.subr.mxu0 0.0
          %1806 = vmatpush1.msra.mxu0 0.0
          %1807 = vmatprep.subr.mxu0 0.0
          %1808 = vmatpush1.msra.mxu0 0.0
          %1809 = vmatprep.subr.mxu0 0.0
          %1810 = vmatpush1.msra.mxu0 0.0
          %1811 = vmatprep.subr.mxu0 0.0
          %1812 = vmatpush1.msra.mxu0 0.0
          %1813 = vmatprep.subr.mxu0 0.0
          %1814 = vmatpush1.msra.mxu0 0.0
          %1815 = vmatprep.subr.mxu0 0.0
          %1816 = vmatpush1.msra.mxu0 0.0
          %1817 = vmatprep.subr.mxu0 0.0
          %1818 = vmatpush1.msra.mxu0 0.0
          %1819 = vmatprep.subr.mxu0 0.0
          %1820 = vmatpush1.msra.mxu0 0.0
          %1821 = vmatprep.subr.mxu0 0.0
          %1822 = vmatpush1.msra.mxu0 0.0
          %1823 = vmatprep.subr.mxu0 0.0
          %1824 = vmatpush1.msra.mxu0 0.0
          %1825 = vmatprep.subr.mxu0 0.0
          %1826 = vmatpush1.msra.mxu0 0.0
          %1827 = vmatprep.subr.mxu0 0.0
          %1828 = vmatpush1.msra.mxu0 0.0
          %1829 = vmatprep.mubr.f32.mxu0 0.0
          %1830 = vmatmul.mubr.f32.gmra.mrb[0].mxu0 %v1741
          %v1831 = vpop.f32.mrb[0].mxu0
          %v1832 = vadd.f32 %v1763, %v1831
          %v1833 = vpop.f32.mrb[0].mxu0
          %1834 = vdwg.mxu0
          %v1835 = vmax.f32 %v1832, 0.0
          %v1836 = vld [vmem:[#allocation8] sm:$0xff]
          %v1837 = vld [vmem:[#allocation8 + $0x8] sm:$0xff]
          %v1838 = vld [vmem:[#allocation8 + $0x10] sm:$0xff]
          %v1839 = vld [vmem:[#allocation8 + $0x18] sm:$0xff]
          %v1840 = vld [vmem:[#allocation8 + $0x20] sm:$0xff]
          %v1841 = vld [vmem:[#allocation8 + $0x28] sm:$0xff]
          %v1842 = vld [vmem:[#allocation8 + $0x30] sm:$0xff]
          %v1843 = vld [vmem:[#allocation8 + $0x38] sm:$0xff]
          %v1844 = vld [vmem:[#allocation8 + $0x40] sm:$0xff]
          %v1845 = vld [vmem:[#allocation8 + $0x48] sm:$0xff]
          %v1846 = vld [vmem:[#allocation8 + $0x50] sm:$0xff]
          %v1847 = vld [vmem:[#allocation8 + $0x58] sm:$0xff]
          %v1848 = vld [vmem:[#allocation8 + $0x60] sm:$0xff]
          %v1849 = vld [vmem:[#allocation8 + $0x68] sm:$0xff]
          %v1850 = vld [vmem:[#allocation8 + $0x70] sm:$0xff]
          %v1851 = vld [vmem:[#allocation8 + $0x78] sm:$0xff]
          %v1852 = vld [vmem:[%s9] sm:$0x1]
          %v1854 = vlaneseq
          %v1855 = vshrl.u32 %v1854, 7
          %v1856 = vsub.s32 0, %v1855
          %v1857 = vrot.slane %v1852, %v1856
          %1859 = vmatprep.subr.mxu0 0.0
          %1860 = vmatpush1.msra.mxu0 %v1836
          %1861 = vmatprep.subr.mxu0 0.0
          %1862 = vmatpush1.msra.mxu0 %v1837
          %1863 = vmatprep.subr.mxu0 0.0
          %1864 = vmatpush1.msra.mxu0 %v1838
          %1865 = vmatprep.subr.mxu0 0.0
          %1866 = vmatpush1.msra.mxu0 %v1839
          %1867 = vmatprep.subr.mxu0 0.0
          %1868 = vmatpush1.msra.mxu0 %v1840
          %1869 = vmatprep.subr.mxu0 0.0
          %1870 = vmatpush1.msra.mxu0 %v1841
          %1871 = vmatprep.subr.mxu0 0.0
          %1872 = vmatpush1.msra.mxu0 %v1842
          %1873 = vmatprep.subr.mxu0 0.0
          %1874 = vmatpush1.msra.mxu0 %v1843
          %1875 = vmatprep.subr.mxu0 0.0
          %1876 = vmatpush1.msra.mxu0 %v1844
          %1877 = vmatprep.subr.mxu0 0.0
          %1878 = vmatpush1.msra.mxu0 %v1845
          %1879 = vmatprep.subr.mxu0 0.0
          %1880 = vmatpush1.msra.mxu0 %v1846
          %1881 = vmatprep.subr.mxu0 0.0
          %1882 = vmatpush1.msra.mxu0 %v1847
          %1883 = vmatprep.subr.mxu0 0.0
          %1884 = vmatpush1.msra.mxu0 %v1848
          %1885 = vmatprep.subr.mxu0 0.0
          %1886 = vmatpush1.msra.mxu0 %v1849
          %1887 = vmatprep.subr.mxu0 0.0
          %1888 = vmatpush1.msra.mxu0 %v1850
          %1889 = vmatprep.subr.mxu0 0.0
          %1890 = vmatpush1.msra.mxu0 %v1851
          %1891 = vmatprep.subr.mxu0 0.0
          %1892 = vmatpush1.msra.mxu0 0.0
          %1893 = vmatprep.subr.mxu0 0.0
          %1894 = vmatpush1.msra.mxu0 0.0
          %1895 = vmatprep.subr.mxu0 0.0
          %1896 = vmatpush1.msra.mxu0 0.0
          %1897 = vmatprep.subr.mxu0 0.0
          %1898 = vmatpush1.msra.mxu0 0.0
          %1899 = vmatprep.subr.mxu0 0.0
          %1900 = vmatpush1.msra.mxu0 0.0
          %1901 = vmatprep.subr.mxu0 0.0
          %1902 = vmatpush1.msra.mxu0 0.0
          %1903 = vmatprep.subr.mxu0 0.0
          %1904 = vmatpush1.msra.mxu0 0.0
          %1905 = vmatprep.subr.mxu0 0.0
          %1906 = vmatpush1.msra.mxu0 0.0
          %1907 = vmatprep.subr.mxu0 0.0
          %1908 = vmatpush1.msra.mxu0 0.0
          %1909 = vmatprep.subr.mxu0 0.0
          %1910 = vmatpush1.msra.mxu0 0.0
          %1911 = vmatprep.subr.mxu0 0.0
          %1912 = vmatpush1.msra.mxu0 0.0
          %1913 = vmatprep.subr.mxu0 0.0
          %1914 = vmatpush1.msra.mxu0 0.0
          %1915 = vmatprep.subr.mxu0 0.0
          %1916 = vmatpush1.msra.mxu0 0.0
          %1917 = vmatprep.subr.mxu0 0.0
          %1918 = vmatpush1.msra.mxu0 0.0
          %1919 = vmatprep.subr.mxu0 0.0
          %1920 = vmatpush1.msra.mxu0 0.0
          %1921 = vmatprep.subr.mxu0 0.0
          %1922 = vmatpush1.msra.mxu0 0.0
          %1923 = vmatprep.mubr.f32.mxu0 0.0
          %1924 = vmatmul.mubr.f32.gmra.mrb[0].mxu0 %v1835
          %v1925 = vpop.f32.mrb[0].mxu0
          %v1926 = vadd.f32 %v1857, %v1925
          %v1927 = vpop.f32.mrb[0].mxu0
          %1928 = vdwg.mxu0
          %v1929 = vlaneseq
          %v1930 = vand.u32 %v1929, 127
          %vm1931 = vcmp.lt.s32.totalorder %v1930, 10
          %v1932 = vsel %vm1931, %v1926, -1e+30
          %vm1933 = vcmask 1043456
          %v1934 = vsel %vm1933, %v1932, -inf
          %1935 = vmax.xlane.f32.xlu0 %v1934
          %v1936 = vpop.xlane.xlu0 %1935
          %v1937 = vsub.f32 %v1932, %v1936
          %v1938 = vmul.f32 %v1937, 1.442695
          %v1939 = vpow.pop %v1938
          %v1940 = vsel %vm1931, %v1939, 0.0
          %v1941 = vsel %vm1933, %v1940, 0.0
          %1942 = vadd.xlane.f32.xlu0 %v1941
          %v1943 = vpop.xlane.xlu0 %1942
          %v1944 = vrcp.pop %v1943
          %v1945 = vmul.f32 %v1940, %v1944
          %v1946 = vsel %vm1933, %v1945, 0.0
          %v1947 = vrot.slane %v1946, 4
          %v1948 = vadd.f32 %v1946, %v1947
          %v1949 = vrot.slane %v1948, 2
          %v1950 = vadd.f32 %v1948, %v1949
          %v1951 = vrot.slane %v1950, 1
          %v1952 = vadd.f32 %v1950, %v1951
          %v1953 = vrcp.pop 4.0
          %v1954 = vmul.f32 %v1952, %v1953
          %1955 = vst [vmem:[%s576] sm:$0x1] %v1718
          %1956 = vst [vmem:[%s582] sm:$0x1] %v1723
          %1957 = vst [vmem:[%s589] sm:$0xf] %v1741
          %1958 = vst [vmem:[%s596] sm:$0xf] %v1835
          %1959 = vst [vmem:[%s603] sm:$0xf] %v1926
          %1960 = vst [vmem:[%s609] sm:$0x1] %v1954
        $region80: #{tpu_custom_call.1} parent=59 // pred_fallthru
          _
        %s1961 = sand.u32 %s283, 1
        %s1962 = scalar_lea.sflag [#allocation5], %s1961
        %s1963 = sand.u32 %s283, 1
        %s1964 = scalar_lea.vmem [#allocation9], %s1963
        %s1965 = sand.u32 %s41, 1
        %s1966 = scalar_lea.sflag [#allocation11], %s1965
        %s1967 = sand.u32 %s309, 1
        %s1968 = scalar_lea.vmem [#allocation10], %s1967
        %s1969 = sand.u32 %s41, 1
        %s1970 = scalar_lea.sflag [#allocation11], %s1969
        %s1971 = sand.u32 %s335, 1
        %s1972 = smul.addr %s1971, 4
        %s1973 = scalar_lea.vmem [#allocation12], %s1972
        %s1974 = sand.u32 %s41, 1
        %s1975 = scalar_lea.sflag [#allocation14], %s1974
        %s1976 = sand.u32 %s361, 1
        %s1977 = smul.addr %s1976, 4
        %s1978 = scalar_lea.vmem [#allocation13], %s1977
        %s1979 = sand.u32 %s41, 1
        %s1980 = scalar_lea.sflag [#allocation14], %s1979
        %s1981 = sand.u32 %s387, 1
        %s1982 = smul.addr %s1981, 4
        %s1983 = scalar_lea.vmem [#allocation15], %s1982
        %s1984 = sand.u32 %s413, 1
        %s1985 = scalar_lea.sflag [#allocation17], %s1984
        %s1986 = sand.u32 %s413, 1
        %s1987 = scalar_lea.vmem [#allocation16], %s1986
        // Predicated region
        $region81: #{tpu_custom_call.1} parent=59 // pred_check
          %p1988 = pneg %p293
        $region82: #{tpu_custom_call.1} parent=59 // pred_check_branch
          %1990 = sbr.rel (%p1988) target = $region84
        $region83: #{tpu_custom_call.1} parent=59 // pred_region
          %s1992 = ssub.s32 16, 16
          %1993 = vsyncadd %s1962, %s1992
          %s1994 = smul.addr %s45, 16
          %s1995 = scalar_lea.hbm %s10, %s1994
          %s1997 = sshll.u32 %s1964, 4
          %s1998 = int_to_ptr.vmem [resolvable:$true] %s1997
          %2000 = dma.vmem_to_hbm [thread:$0]  %s1998, 16, %s1995, %s1962
        $region84: #{tpu_custom_call.1} parent=59 // pred_fallthru
          _
        // Predicated region
        $region85: #{tpu_custom_call.1} parent=59 // pred_check
          %p2001 = pneg %p319
        $region86: #{tpu_custom_call.1} parent=59 // pred_check_branch
          %2003 = sbr.rel (%p2001) target = $region88
        $region87: #{tpu_custom_call.1} parent=59 // pred_region
          %s2005 = ssub.s32 16, 16
          %2006 = vsyncadd %s1966, %s2005
          %s2007 = smul.addr %s45, 16
          %s2008 = scalar_lea.hbm %s11, %s2007
          %s2010 = sshll.u32 %s1968, 4
          %s2011 = int_to_ptr.vmem [resolvable:$true] %s2010
          %2013 = dma.vmem_to_hbm [thread:$0]  %s2011, 16, %s2008, %s1966
        $region88: #{tpu_custom_call.1} parent=59 // pred_fallthru
          _
        // Predicated region
        $region89: #{tpu_custom_call.1} parent=59 // pred_check
          %p2014 = pneg %p345
        $region90: #{tpu_custom_call.1} parent=59 // pred_check_branch
          %2016 = sbr.rel (%p2014) target = $region92
        $region91: #{tpu_custom_call.1} parent=59 // pred_region
          %s2018 = ssub.s32 64, 64
          %2019 = vsyncadd %s1970, %s2018
          %s2020 = smul.addr %s45, 64
          %s2021 = scalar_lea.hbm %s12, %s2020
          %s2023 = sshll.u32 %s1973, 4
          %s2024 = int_to_ptr.vmem [resolvable:$true] %s2023
          %2026 = dma.vmem_to_hbm [thread:$0]  %s2024, 64, %s2021, %s1970
        $region92: #{tpu_custom_call.1} parent=59 // pred_fallthru
          _
        // Predicated region
        $region93: #{tpu_custom_call.1} parent=59 // pred_check
          %p2027 = pneg %p371
        $region94: #{tpu_custom_call.1} parent=59 // pred_check_branch
          %2029 = sbr.rel (%p2027) target = $region96
        $region95: #{tpu_custom_call.1} parent=59 // pred_region
          %s2031 = ssub.s32 64, 64
          %2032 = vsyncadd %s1975, %s2031
          %s2033 = smul.addr %s45, 64
          %s2034 = scalar_lea.hbm %s13, %s2033
          %s2036 = sshll.u32 %s1978, 4
          %s2037 = int_to_ptr.vmem [resolvable:$true] %s2036
          %2039 = dma.vmem_to_hbm [thread:$0]  %s2037, 64, %s2034, %s1975
        $region96: #{tpu_custom_call.1} parent=59 // pred_fallthru
          _
        // Predicated region
        $region97: #{tpu_custom_call.1} parent=59 // pred_check
          %p2040 = pneg %p397
        $region98: #{tpu_custom_call.1} parent=59 // pred_check_branch
          %2042 = sbr.rel (%p2040) target = $region100
        $region99: #{tpu_custom_call.1} parent=59 // pred_region
          %s2044 = ssub.s32 64, 64
          %2045 = vsyncadd %s1980, %s2044
          %s2046 = smul.addr %s45, 64
          %s2047 = scalar_lea.hbm %s14, %s2046
          %s2049 = sshll.u32 %s1983, 4
          %s2050 = int_to_ptr.vmem [resolvable:$true] %s2049
          %2052 = dma.vmem_to_hbm [thread:$0]  %s2050, 64, %s2047, %s1980
        $region100: #{tpu_custom_call.1} parent=59 // pred_fallthru
          _
        // Predicated region
        $region101: #{tpu_custom_call.1} parent=59 // pred_check
          %p2053 = pneg %p423
        $region102: #{tpu_custom_call.1} parent=59 // pred_check_branch
          %2055 = sbr.rel (%p2053) target = $region104
        $region103: #{tpu_custom_call.1} parent=59 // pred_region
          %s2057 = ssub.s32 16, 16
          %2058 = vsyncadd %s1985, %s2057
          %s2059 = smul.addr %s45, 16
          %s2060 = scalar_lea.hbm %s15, %s2059
          %s2062 = sshll.u32 %s1987, 4
          %s2063 = int_to_ptr.vmem [resolvable:$true] %s2062
          %2065 = dma.vmem_to_hbm [thread:$0]  %s2063, 16, %s2060, %s1985
        $region104: #{tpu_custom_call.1} parent=59 // pred_fallthru
          _
      $region60: #{tpu_custom_call.1} parent=5 // pred_fallthru
        _
      %p2066 = scmp.le.s32.totalorder 2, %s36
      // Predicated region
      $region105: #{tpu_custom_call.1} parent=5 // pred_check
        %p2067 = pneg %p2066
      $region106: #{tpu_custom_call.1} parent=5 // pred_check_branch
        %2069 = sbr.rel (%p2067) target = $region108
      $region107: #{tpu_custom_call.1} parent=5 // pred_region
        %s2070 = ssub.s32 %s36, 2
        // Predicated region
        $region109: #{tpu_custom_call.1} parent=107 // pred_check
          %p2071 = pneg %p299
        $region110: #{tpu_custom_call.1} parent=107 // pred_check_branch
          %2073 = sbr.rel (%p2071) target = $region112
        $region111: #{tpu_custom_call.1} parent=107 // pred_region
          %s2074 = sand.u32 %s284, 1
          %s2075 = scalar_lea.sflag [#allocation5], %s2074
          %s2076 = sand.u32 %s284, 1
          %s2077 = scalar_lea.vmem [#allocation9], %s2076
          %2078 = dma.done %s2075, 16
        $region112: #{tpu_custom_call.1} parent=107 // pred_fallthru
          _
        // Predicated region
        $region113: #{tpu_custom_call.1} parent=107 // pred_check
          %p2079 = pneg %p325
        $region114: #{tpu_custom_call.1} parent=107 // pred_check_branch
          %2081 = sbr.rel (%p2079) target = $region116
        $region115: #{tpu_custom_call.1} parent=107 // pred_region
          %s2082 = sand.u32 %s42, 1
          %s2083 = scalar_lea.sflag [#allocation11], %s2082
          %s2084 = sand.u32 %s310, 1
          %s2085 = scalar_lea.vmem [#allocation10], %s2084
          %2086 = dma.done %s2083, 16
        $region116: #{tpu_custom_call.1} parent=107 // pred_fallthru
          _
        // Predicated region
        $region117: #{tpu_custom_call.1} parent=107 // pred_check
          %p2087 = pneg %p351
        $region118: #{tpu_custom_call.1} parent=107 // pred_check_branch
          %2089 = sbr.rel (%p2087) target = $region120
        $region119: #{tpu_custom_call.1} parent=107 // pred_region
          %s2090 = sand.u32 %s42, 1
          %s2091 = scalar_lea.sflag [#allocation11], %s2090
          %s2092 = sand.u32 %s336, 1
          %s2093 = smul.addr %s2092, 4
          %s2094 = scalar_lea.vmem [#allocation12], %s2093
          %2095 = dma.done %s2091, 64
        $region120: #{tpu_custom_call.1} parent=107 // pred_fallthru
          _
        // Predicated region
        $region121: #{tpu_custom_call.1} parent=107 // pred_check
          %p2096 = pneg %p377
        $region122: #{tpu_custom_call.1} parent=107 // pred_check_branch
          %2098 = sbr.rel (%p2096) target = $region124
        $region123: #{tpu_custom_call.1} parent=107 // pred_region
          %s2099 = sand.u32 %s42, 1
          %s2100 = scalar_lea.sflag [#allocation14], %s2099
          %s2101 = sand.u32 %s362, 1
          %s2102 = smul.addr %s2101, 4
          %s2103 = scalar_lea.vmem [#allocation13], %s2102
          %2104 = dma.done %s2100, 64
        $region124: #{tpu_custom_call.1} parent=107 // pred_fallthru
          _
        // Predicated region
        $region125: #{tpu_custom_call.1} parent=107 // pred_check
          %p2105 = pneg %p403
        $region126: #{tpu_custom_call.1} parent=107 // pred_check_branch
          %2107 = sbr.rel (%p2105) target = $region128
        $region127: #{tpu_custom_call.1} parent=107 // pred_region
          %s2108 = sand.u32 %s42, 1
          %s2109 = scalar_lea.sflag [#allocation14], %s2108
          %s2110 = sand.u32 %s388, 1
          %s2111 = smul.addr %s2110, 4
          %s2112 = scalar_lea.vmem [#allocation15], %s2111
          %2113 = dma.done %s2109, 64
        $region128: #{tpu_custom_call.1} parent=107 // pred_fallthru
          _
        // Predicated region
        $region129: #{tpu_custom_call.1} parent=107 // pred_check
          %p2114 = pneg %p429
        $region130: #{tpu_custom_call.1} parent=107 // pred_check_branch
          %2116 = sbr.rel (%p2114) target = $region132
        $region131: #{tpu_custom_call.1} parent=107 // pred_region
          %s2117 = sand.u32 %s414, 1
          %s2118 = scalar_lea.sflag [#allocation17], %s2117
          %s2119 = sand.u32 %s414, 1
          %s2120 = scalar_lea.vmem [#allocation16], %s2119
          %2121 = dma.done %s2118, 16
        $region132: #{tpu_custom_call.1} parent=107 // pred_fallthru
          _
      $region108: #{tpu_custom_call.1} parent=5 // pred_fallthru
        _
    $region6: #{tpu_custom_call.1} parent=1 // loop_footer
      %s40 = sadd.s32 1, %s36
    $region7: #{tpu_custom_call.1} parent=1 // loop_footer_branch
      %35 = sbr.rel target = $region3
    $region8: #{tpu_custom_call.1} parent=1 // loop_exit
      _
    %2122 = vsyncpa [#allocation4], 1
    %s2123 = scalar_lea.sflag [#allocation4], 1
    %2124 = vsyncpa %s2123, 1
    %2125 = vsyncpa [#allocation7], 1
    %2126 = vsyncpa [#allocation5], 1
    %s2127 = scalar_lea.sflag [#allocation5], 1
    %2128 = vsyncpa %s2127, 1
    %2129 = vsyncpa [#allocation11], 1
    %s2130 = scalar_lea.sflag [#allocation11], 1
    %2131 = vsyncpa %s2130, 1
    %2132 = vsyncpa [#allocation14], 1
    %s2133 = scalar_lea.sflag [#allocation14], 1
    %2134 = vsyncpa %s2133, 1
    %2135 = vsyncpa [#allocation17], 1
    %s2136 = scalar_lea.sflag [#allocation17], 1
    %2137 = vsyncpa %s2136, 1

</llo_original>
